<compile_context>
chip_gen: v6e
topology: v6e:2x2x1
jax: 0.10.0
libtpu: 0.0.40
codegen_flags: <defaults>
</compile_context>

<pallas_src>
import functools

import jax
import jax.numpy as jnp
import numpy as np
from jax import lax
from jax.experimental import pallas as pl
from jax.experimental.pallas import tpu as pltpu

EPS = 1e-5  # PyTorch BatchNorm default eps


def _round_up(n, m):
    return (n + m - 1) // m * m


# ------------------------------ Pallas kernel ------------------------------

def _fashion_kernel(x_ref, m1_ref, cb1_ref, bn1_ref, m2_ref, cb2_ref, bn2_ref,
                    w1_ref, hv_ref, w2_ref, b2_ref, o_ref):
    f32 = jnp.float32
    bf16 = jnp.bfloat16
    bt = x_ref.shape[0]

    # x_ref: (bt, 7, 112) bf16 -- row i holds original image rows 4i..4i+3 (28 lanes each).
    xr = x_ref[...]

    # ---- stage 1: conv1(5x5, 1->5) + bias + ReLU + 2x2 max-pool (one MXU matmul) ----
    # L1 row (b, u) = 6 consecutive image rows concatenated along lanes (28 each):
    #   even pooled rows p=2u   -> image rows 4u   .. 4u+5
    #   odd  pooled rows p=2u+1 -> image rows 4u+2 .. 4u+7
    l1e = jnp.concatenate([xr[:, 0:6, :], xr[:, 1:7, 0:56]], axis=-1)      # (bt, 6, 168)
    l1o = jnp.concatenate([xr[:, 0:6, 56:112], xr[:, 1:7, :]], axis=-1)    # (bt, 6, 168)
    l1 = jnp.concatenate([l1e, l1o], axis=1).reshape(bt * 12, 168)
    # m1 emits 4 blocks of 64 lanes: (row parity, col parity); lane q*5+co inside a block.
    y1 = jnp.dot(l1, m1_ref[...], preferred_element_type=f32)              # (bt*12, 256)
    y1 = jnp.maximum(y1 + cb1_ref[...], 0.0)
    p1 = jnp.maximum(y1[:, 0:128], y1[:, 128:256])                         # pool: row parity
    z1 = jnp.maximum(p1[:, 0:64], p1[:, 64:128])                           # pool: col parity
    z1 = (z1 * bn1_ref[0:1, :] + bn1_ref[1:2, :]).astype(bf16)             # folded eval bn1
    z1 = z1.reshape(bt, 12, 64)  # rows 0..5: pooled rows 0,2,..,10 ; rows 6..11: 1,3,..,11

    # ---- stage 2: conv2(5x5, 5->10) + bias + ReLU + 2x2 max-pool ----
    # chunk j of L2 row (b, p') = pooled-map row 2p'+j (lanes q*5+ci, 60 valid of 64).
    l2 = jnp.concatenate([z1[:, 0:4], z1[:, 6:10], z1[:, 1:5],
                          z1[:, 7:11], z1[:, 2:6], z1[:, 8:12]], axis=-1)  # (bt, 4, 384)
    y2 = jnp.dot(l2.reshape(bt * 4, 384), m2_ref[...], preferred_element_type=f32)
    y2 = jnp.maximum(y2 + cb2_ref[...], 0.0)
    p2 = jnp.maximum(y2[:, 0:128], y2[:, 128:256])
    z2 = jnp.maximum(p2[:, 0:64], p2[:, 64:128])                           # (bt*4, 64)
    z2 = (z2 * bn2_ref[0:1, :] + bn2_ref[1:2, :]).astype(bf16)             # folded eval bn2

    # ---- stage 3: fc1 + ReLU + bn3 + fc2 (plain matmuls, batch chunk = M dim) ----
    z2r = z2.reshape(bt, 4, 64)
    zf = jnp.concatenate([z2r[:, 0, :], z2r[:, 1, :], z2r[:, 2, :], z2r[:, 3, :]],
                         axis=-1)                                          # (bt, 256)
    h = jnp.dot(zf, w1_ref[...], preferred_element_type=f32)               # (bt, 80)
    h = jnp.maximum(h + hv_ref[0:1, :], 0.0)                               # fc1 bias + ReLU
    h = h * hv_ref[1:2, :] + hv_ref[2:3, :]                                # folded eval bn3
    o_ref[...] = (jnp.dot(h.astype(bf16), w2_ref[...], preferred_element_type=f32)
                  + b2_ref[...])


# --------------------- weight preprocessing (host, numpy) ------------------

def _bn_fold(g, b, m, v):
    s = g / np.sqrt(v + EPS)
    return s, b - m * s


def _conv_pool_matrix(w, pooled_cols, in_blk):
    """Fused conv(5x5) + 2x2-pool-parity Toeplitz matrix.

    Input lanes : 6 chunks of `in_blk`; chunk j, lane wi*Ci+ci = (row base+j, col wi, ch ci).
    Output lanes: 4 blocks of 64 = (row parity rp, col parity cp); inside a block lane
                  q*Co+co = conv output at (row base+rp, col 2q+cp), out-channel co.
    """
    co_n, ci_n, kh, kw = w.shape
    mat = np.zeros((6 * in_blk, 256), np.float32)
    for rp in range(2):
        for cp in range(2):
            off = rp * 128 + cp * 64
            for qo in range(pooled_cols):
                ow = 2 * qo + cp
                for ki in range(kh):
                    j = ki + rp
                    for kj in range(kw):
                        wi = ow + kj
                        for ci in range(ci_n):
                            row = j * in_blk + wi * ci_n + ci
                            mat[row, off + qo * co_n:off + (qo + 1) * co_n] = w[:, ci, ki, kj]
    return mat


def _bias_quad(b, pooled_cols):
    v = np.zeros((1, 256), np.float32)
    for rp in range(2):
        for cp in range(2):
            off = rp * 128 + cp * 64
            v[0, off:off + pooled_cols * b.size] = np.tile(b, pooled_cols)
    return v


def _bn_lanes(s, t, reps):
    out = np.zeros((2, 64), np.float32)
    out[0, :reps * s.size] = np.tile(s, reps)
    out[1, :reps * t.size] = np.tile(t, reps)
    return out


def _fc1_matrix(fc1_w):
    """(80, 160) torch fc1 weight -> (256, 80) in the kernel's z2 lane layout."""
    m = np.zeros((256, 80), np.float32)
    for h in range(4):
        for q in range(4):
            for c in range(10):
                m[h * 64 + q * 10 + c, :] = fc1_w[:, c * 16 + h * 4 + q]
    return m


def make_consts(p):
    """Fold weights and eval-mode BN stats into the kernel's constant operands."""
    pn = {k: np.asarray(v, np.float32) for k, v in p.items()}
    s1, t1 = _bn_fold(pn["bn1_g"], pn["bn1_b"], pn["bn1_m"], pn["bn1_v"])
    s2, t2 = _bn_fold(pn["bn2_g"], pn["bn2_b"], pn["bn2_m"], pn["bn2_v"])
    s3, t3 = _bn_fold(pn["bn3_g"], pn["bn3_b"], pn["bn3_m"], pn["bn3_v"])
    bf16, f32 = jnp.bfloat16, jnp.float32
    return dict(
        m1=jnp.asarray(_conv_pool_matrix(pn["w1"], 12, 28), bf16),   # (168, 256)
        cb1=jnp.asarray(_bias_quad(pn["b1"], 12), f32),              # (1, 256)
        bn1=jnp.asarray(_bn_lanes(s1, t1, 12), f32),                 # (2, 64)
        m2=jnp.asarray(_conv_pool_matrix(pn["w2"], 4, 64), bf16),    # (384, 256)
        cb2=jnp.asarray(_bias_quad(pn["b2"], 4), f32),               # (1, 256)
        bn2=jnp.asarray(_bn_lanes(s2, t2, 4), f32),                  # (2, 64)
        w1=jnp.asarray(_fc1_matrix(pn["fc1_w"]), bf16),              # (256, 80)
        hv=jnp.asarray(np.stack([pn["fc1_b"], s3, t3]), f32),        # (3, 80)
        w2=jnp.asarray(pn["fc2_w"].T, bf16),                         # (80, 10)
        b2=jnp.asarray(pn["fc2_b"].reshape(1, 10), f32),             # (1, 10)
    )


_CONSTS = ("m1", "cb1", "bn1", "m2", "cb2", "bn2", "w1", "hv", "w2", "b2")


# ------------------------------ wrapper ------------------------------------

def fashion_forward(x_nchw, consts, *, block_b=128):
    """Fused FashionModel forward.  x_nchw: (B, 1, 28, 28) float32."""
    assert block_b % 8 == 0
    B = x_nchw.shape[0]
    bt = min(block_b, _round_up(B, 8))      # batch tile (multiple of 8, fits VMEM easily)
    Bp = _round_up(B, bt)                   # pad the batch instead of collapsing the grid
    x = x_nchw.reshape(B, 7, 112).astype(jnp.bfloat16)   # row i = image rows 4i..4i+3
    if Bp != B:
        x = jnp.pad(x, ((0, Bp - B), (0, 0), (0, 0)))

    def _full(a):
        return pl.BlockSpec(a.shape, lambda i, _nd=a.ndim: (0,) * _nd)

    out = pl.pallas_call(
        _fashion_kernel,
        out_shape=jax.ShapeDtypeStruct((Bp, 10), jnp.float32),
        grid=(Bp // bt,),
        in_specs=[pl.BlockSpec((bt, 7, 112), lambda i: (i, 0, 0))]
                 + [_full(consts[k]) for k in _CONSTS],
        out_specs=pl.BlockSpec((bt, 10), lambda i: (i, 0)),
        compiler_params=pltpu.CompilerParams(dimension_semantics=("parallel",)),
    )(x, *[consts[k] for k in _CONSTS])
    return out[:B]


# ---------------------- pure-XLA reference (for check) ---------------------

def reference_forward(x_nchw, p):
    """XLA reference mirroring the kernel's bf16-operand / f32-accumulate matmul precision."""
    f32, bf16 = jnp.float32, jnp.bfloat16

    def bn(y, g, b, m, v):
        shp = (1, -1) + (1,) * (y.ndim - 2)
        return (y - m.reshape(shp)) / jnp.sqrt(v.reshape(shp) + EPS) * g.reshape(shp) + b.reshape(shp)

    y = lax.conv_general_dilated(x_nchw.astype(bf16), p["w1"].astype(bf16), (1, 1), "VALID",
                                 dimension_numbers=("NCHW", "OIHW", "NCHW"),
                                 preferred_element_type=f32)
    y = jnp.maximum(y + p["b1"].reshape(1, -1, 1, 1), 0.0)
    y = lax.reduce_window(y, -jnp.inf, lax.max, (1, 1, 2, 2), (1, 1, 2, 2), "VALID")
    y = bn(y, p["bn1_g"], p["bn1_b"], p["bn1_m"], p["bn1_v"])
    y = lax.conv_general_dilated(y.astype(bf16), p["w2"].astype(bf16), (1, 1), "VALID",
                                 dimension_numbers=("NCHW", "OIHW", "NCHW"),
                                 preferred_element_type=f32)
    y = jnp.maximum(y + p["b2"].reshape(1, -1, 1, 1), 0.0)
    y = lax.reduce_window(y, -jnp.inf, lax.max, (1, 1, 2, 2), (1, 1, 2, 2), "VALID")
    y = bn(y, p["bn2_g"], p["bn2_b"], p["bn2_m"], p["bn2_v"])
    y = y.reshape(y.shape[0], -1)
    y = jnp.dot(y.astype(bf16), p["fc1_w"].T.astype(bf16), preferred_element_type=f32) + p["fc1_b"]
    y = jnp.maximum(y, 0.0)
    y = bn(y, p["bn3_g"], p["bn3_b"], p["bn3_m"], p["bn3_v"])
    return jnp.dot(y.astype(bf16), p["fc2_w"].T.astype(bf16), preferred_element_type=f32) + p["fc2_b"]


# --------------------------------- main ------------------------------------

def init_params(key):
    ks = iter(jax.random.split(key, 32))
    n = lambda shape, s=0.1: (s * jax.random.normal(next(ks), shape)).astype(jnp.float32)
    u = lambda shape: jax.random.uniform(next(ks), shape, minval=0.5, maxval=1.5).astype(jnp.float32)
    return dict(
        w1=n((5, 1, 5, 5)), b1=n((5,)),
        bn1_g=u((5,)), bn1_b=n((5,)), bn1_m=n((5,)), bn1_v=u((5,)),
        w2=n((10, 5, 5, 5)), b2=n((10,)),
        bn2_g=u((10,)), bn2_b=n((10,)), bn2_m=n((10,)), bn2_v=u((10,)),
        fc1_w=n((80, 160)), fc1_b=n((80,)),
        bn3_g=u((80,)), bn3_b=n((80,)), bn3_m=n((80,)), bn3_v=u((80,)),
        fc2_w=n((10, 80)), fc2_b=n((10,)),
    )


if __name__ == "__main__":
    root = jax.random.PRNGKey(0)
    k_params, k_x = jax.random.split(root)
    params = init_params(k_params)
    # FashionMNIST-shaped input (fc1 size 10*4*4 fixes the 28x28 spatial dims).
    x = jax.random.normal(k_x, (16, 1, 28, 28), dtype=jnp.float32)

    consts = make_consts(params)   # one-time host-side weight/BN folding
    # block_b=8 only so this small self-test runs a multi-step grid; production default is 128.
    fwd = jax.jit(functools.partial(fashion_forward, block_b=8))
    out = jax.block_until_ready(fwd(x, consts))
    ref = jax.block_until_ready(reference_forward(x, params))

    assert out.shape == (16, 10), out.shape
    if not np.allclose(np.asarray(out), np.asarray(ref), atol=1e-2, rtol=1e-2):
        raise AssertionError("Pallas output does not match XLA reference")
    print("KERNEL_OK")
</pallas_src>

<mosaic_0001>
module attributes {stable_mosaic.version = 11 : i64} {
  func.func @_fashion_kernel(%arg0: i32, %arg1: memref<8x7x112xbf16, #tpu.memory_space<vmem>>, %arg2: memref<168x256xbf16, #tpu.memory_space<vmem>>, %arg3: memref<1x256xf32, #tpu.memory_space<vmem>>, %arg4: memref<2x64xf32, #tpu.memory_space<vmem>>, %arg5: memref<384x256xbf16, #tpu.memory_space<vmem>>, %arg6: memref<1x256xf32, #tpu.memory_space<vmem>>, %arg7: memref<2x64xf32, #tpu.memory_space<vmem>>, %arg8: memref<256x80xbf16, #tpu.memory_space<vmem>>, %arg9: memref<3x80xf32, #tpu.memory_space<vmem>>, %arg10: memref<80x10xbf16, #tpu.memory_space<vmem>>, %arg11: memref<1x10xf32, #tpu.memory_space<vmem>>, %arg12: memref<8x10xf32, #tpu.memory_space<vmem>>) attributes {dimension_semantics = [#tpu.dimension_semantics<parallel>], iteration_bounds = array<i64: 2>, scalar_prefetch = 0 : i64, scratch_operands = 0 : i64, tpu.core_type = #tpu.core_type<tc>, window_params = [{transform_indices = @transform_0, window_bounds = array<i64: 8, 7, 112>}, {pipeline_mode = #tpu.pipeline_mode<synchronous>, transform_indices = @transform_1, window_bounds = array<i64: 168, 256>}, {pipeline_mode = #tpu.pipeline_mode<synchronous>, transform_indices = @transform_2, window_bounds = array<i64: 1, 256>}, {pipeline_mode = #tpu.pipeline_mode<synchronous>, transform_indices = @transform_3, window_bounds = array<i64: 2, 64>}, {pipeline_mode = #tpu.pipeline_mode<synchronous>, transform_indices = @transform_4, window_bounds = array<i64: 384, 256>}, {pipeline_mode = #tpu.pipeline_mode<synchronous>, transform_indices = @transform_5, window_bounds = array<i64: 1, 256>}, {pipeline_mode = #tpu.pipeline_mode<synchronous>, transform_indices = @transform_6, window_bounds = array<i64: 2, 64>}, {pipeline_mode = #tpu.pipeline_mode<synchronous>, transform_indices = @transform_7, window_bounds = array<i64: 256, 80>}, {pipeline_mode = #tpu.pipeline_mode<synchronous>, transform_indices = @transform_8, window_bounds = array<i64: 3, 80>}, {pipeline_mode = #tpu.pipeline_mode<synchronous>, transform_indices = @transform_9, window_bounds = array<i64: 80, 10>}, {pipeline_mode = #tpu.pipeline_mode<synchronous>, transform_indices = @transform_10, window_bounds = array<i64: 1, 10>}, {transform_indices = @transform_11, window_bounds = array<i64: 8, 10>}]} {
    %c0 = arith.constant 0 : index
    %c0_0 = arith.constant 0 : index
    %c0_1 = arith.constant 0 : index
    %0 = vector.load %arg1[%c0, %c0_0, %c0_1] : memref<8x7x112xbf16, #tpu.memory_space<vmem>>, vector<8x7x112xbf16>
    %1 = vector.extract_strided_slice %0 {offsets = [0, 0, 0], sizes = [8, 6, 112], strides = [1, 1, 1]} : vector<8x7x112xbf16> to vector<8x6x112xbf16>
    %2 = vector.extract_strided_slice %0 {offsets = [0, 1, 0], sizes = [8, 6, 56], strides = [1, 1, 1]} : vector<8x7x112xbf16> to vector<8x6x56xbf16>
    %3 = tpu.concatenate %1, %2 in 2 : vector<8x6x112xbf16>, vector<8x6x56xbf16> -> vector<8x6x168xbf16>
    %4 = vector.extract_strided_slice %0 {offsets = [0, 0, 56], sizes = [8, 6, 56], strides = [1, 1, 1]} : vector<8x7x112xbf16> to vector<8x6x56xbf16>
    %5 = vector.extract_strided_slice %0 {offsets = [0, 1, 0], sizes = [8, 6, 112], strides = [1, 1, 1]} : vector<8x7x112xbf16> to vector<8x6x112xbf16>
    %6 = tpu.concatenate %4, %5 in 2 : vector<8x6x56xbf16>, vector<8x6x112xbf16> -> vector<8x6x168xbf16>
    %7 = tpu.concatenate %3, %6 in 1 : vector<8x6x168xbf16>, vector<8x6x168xbf16> -> vector<8x12x168xbf16>
    %8 = vector.shape_cast %7 : vector<8x12x168xbf16> to vector<96x168xbf16>
    %c0_2 = arith.constant 0 : index
    %c0_3 = arith.constant 0 : index
    %9 = vector.load %arg2[%c0_2, %c0_3] : memref<168x256xbf16, #tpu.memory_space<vmem>>, vector<168x256xbf16>
    %cst = arith.constant dense<0.000000e+00> : vector<96x256xf32>
    %10 = tpu.matmul %8, %9, %cst {dimension_numbers = #tpu.dot_dimension_numbers<[1], [0], [0], [1], [0, 0, 1, 1], [], []>} : vector<96x168xbf16>, vector<168x256xbf16>, vector<96x256xf32> -> vector<96x256xf32>
    %c0_4 = arith.constant 0 : index
    %c0_5 = arith.constant 0 : index
    %11 = vector.load %arg3[%c0_4, %c0_5] : memref<1x256xf32, #tpu.memory_space<vmem>>, vector<1x256xf32>
    %12 = vector.broadcast %11 : vector<1x256xf32> to vector<96x256xf32>
    %13 = arith.addf %10, %12 : vector<96x256xf32>
    %cst_6 = arith.constant 0.000000e+00 : f32
    %14 = vector.broadcast %cst_6 : f32 to vector<96x256xf32>
    %15 = arith.maximumf %13, %14 : vector<96x256xf32>
    %16 = vector.extract_strided_slice %15 {offsets = [0, 0], sizes = [96, 128], strides = [1, 1]} : vector<96x256xf32> to vector<96x128xf32>
    %17 = vector.extract_strided_slice %15 {offsets = [0, 128], sizes = [96, 128], strides = [1, 1]} : vector<96x256xf32> to vector<96x128xf32>
    %18 = arith.maximumf %16, %17 : vector<96x128xf32>
    %19 = vector.extract_strided_slice %18 {offsets = [0, 0], sizes = [96, 64], strides = [1, 1]} : vector<96x128xf32> to vector<96x64xf32>
    %20 = vector.extract_strided_slice %18 {offsets = [0, 64], sizes = [96, 64], strides = [1, 1]} : vector<96x128xf32> to vector<96x64xf32>
    %21 = arith.maximumf %19, %20 : vector<96x64xf32>
    %c0_7 = arith.constant 0 : index
    %c0_8 = arith.constant 0 : index
    %22 = vector.load %arg4[%c0_7, %c0_8] : memref<2x64xf32, #tpu.memory_space<vmem>>, vector<1x64xf32>
    %23 = vector.broadcast %22 : vector<1x64xf32> to vector<96x64xf32>
    %24 = arith.mulf %21, %23 : vector<96x64xf32>
    %c1 = arith.constant 1 : index
    %c0_9 = arith.constant 0 : index
    %25 = vector.load %arg4[%c1, %c0_9] : memref<2x64xf32, #tpu.memory_space<vmem>>, vector<1x64xf32>
    %26 = vector.broadcast %25 : vector<1x64xf32> to vector<96x64xf32>
    %27 = arith.addf %24, %26 : vector<96x64xf32>
    %28 = arith.truncf %27 : vector<96x64xf32> to vector<96x64xbf16>
    %29 = vector.shape_cast %28 : vector<96x64xbf16> to vector<8x12x64xbf16>
    %30 = vector.extract_strided_slice %29 {offsets = [0, 0, 0], sizes = [8, 4, 64], strides = [1, 1, 1]} : vector<8x12x64xbf16> to vector<8x4x64xbf16>
    %31 = vector.extract_strided_slice %29 {offsets = [0, 6, 0], sizes = [8, 4, 64], strides = [1, 1, 1]} : vector<8x12x64xbf16> to vector<8x4x64xbf16>
    %32 = vector.extract_strided_slice %29 {offsets = [0, 1, 0], sizes = [8, 4, 64], strides = [1, 1, 1]} : vector<8x12x64xbf16> to vector<8x4x64xbf16>
    %33 = vector.extract_strided_slice %29 {offsets = [0, 7, 0], sizes = [8, 4, 64], strides = [1, 1, 1]} : vector<8x12x64xbf16> to vector<8x4x64xbf16>
    %34 = vector.extract_strided_slice %29 {offsets = [0, 2, 0], sizes = [8, 4, 64], strides = [1, 1, 1]} : vector<8x12x64xbf16> to vector<8x4x64xbf16>
    %35 = vector.extract_strided_slice %29 {offsets = [0, 8, 0], sizes = [8, 4, 64], strides = [1, 1, 1]} : vector<8x12x64xbf16> to vector<8x4x64xbf16>
    %36 = tpu.concatenate %30, %31, %32, %33, %34, %35 in 2 : vector<8x4x64xbf16>, vector<8x4x64xbf16>, vector<8x4x64xbf16>, vector<8x4x64xbf16>, vector<8x4x64xbf16>, vector<8x4x64xbf16> -> vector<8x4x384xbf16>
    %37 = vector.shape_cast %36 : vector<8x4x384xbf16> to vector<32x384xbf16>
    %c0_10 = arith.constant 0 : index
    %c0_11 = arith.constant 0 : index
    %38 = vector.load %arg5[%c0_10, %c0_11] : memref<384x256xbf16, #tpu.memory_space<vmem>>, vector<384x256xbf16>
    %cst_12 = arith.constant dense<0.000000e+00> : vector<32x256xf32>
    %39 = tpu.matmul %37, %38, %cst_12 {dimension_numbers = #tpu.dot_dimension_numbers<[1], [0], [0], [1], [0, 0, 1, 1], [], []>} : vector<32x384xbf16>, vector<384x256xbf16>, vector<32x256xf32> -> vector<32x256xf32>
    %c0_13 = arith.constant 0 : index
    %c0_14 = arith.constant 0 : index
    %40 = vector.load %arg6[%c0_13, %c0_14] : memref<1x256xf32, #tpu.memory_space<vmem>>, vector<1x256xf32>
    %41 = vector.broadcast %40 : vector<1x256xf32> to vector<32x256xf32>
    %42 = arith.addf %39, %41 : vector<32x256xf32>
    %cst_15 = arith.constant 0.000000e+00 : f32
    %43 = vector.broadcast %cst_15 : f32 to vector<32x256xf32>
    %44 = arith.maximumf %42, %43 : vector<32x256xf32>
    %45 = vector.extract_strided_slice %44 {offsets = [0, 0], sizes = [32, 128], strides = [1, 1]} : vector<32x256xf32> to vector<32x128xf32>
    %46 = vector.extract_strided_slice %44 {offsets = [0, 128], sizes = [32, 128], strides = [1, 1]} : vector<32x256xf32> to vector<32x128xf32>
    %47 = arith.maximumf %45, %46 : vector<32x128xf32>
    %48 = vector.extract_strided_slice %47 {offsets = [0, 0], sizes = [32, 64], strides = [1, 1]} : vector<32x128xf32> to vector<32x64xf32>
    %49 = vector.extract_strided_slice %47 {offsets = [0, 64], sizes = [32, 64], strides = [1, 1]} : vector<32x128xf32> to vector<32x64xf32>
    %50 = arith.maximumf %48, %49 : vector<32x64xf32>
    %c0_16 = arith.constant 0 : index
    %c0_17 = arith.constant 0 : index
    %51 = vector.load %arg7[%c0_16, %c0_17] : memref<2x64xf32, #tpu.memory_space<vmem>>, vector<1x64xf32>
    %52 = vector.broadcast %51 : vector<1x64xf32> to vector<32x64xf32>
    %53 = arith.mulf %50, %52 : vector<32x64xf32>
    %c1_18 = arith.constant 1 : index
    %c0_19 = arith.constant 0 : index
    %54 = vector.load %arg7[%c1_18, %c0_19] : memref<2x64xf32, #tpu.memory_space<vmem>>, vector<1x64xf32>
    %55 = vector.broadcast %54 : vector<1x64xf32> to vector<32x64xf32>
    %56 = arith.addf %53, %55 : vector<32x64xf32>
    %57 = arith.truncf %56 : vector<32x64xf32> to vector<32x64xbf16>
    %58 = vector.shape_cast %57 : vector<32x64xbf16> to vector<8x4x64xbf16>
    %59 = vector.extract_strided_slice %58 {offsets = [0, 0, 0], sizes = [8, 1, 64], strides = [1, 1, 1]} : vector<8x4x64xbf16> to vector<8x1x64xbf16>
    %60 = vector.shape_cast %59 : vector<8x1x64xbf16> to vector<8x64xbf16>
    %61 = vector.extract_strided_slice %58 {offsets = [0, 1, 0], sizes = [8, 1, 64], strides = [1, 1, 1]} : vector<8x4x64xbf16> to vector<8x1x64xbf16>
    %62 = vector.shape_cast %61 : vector<8x1x64xbf16> to vector<8x64xbf16>
    %63 = vector.extract_strided_slice %58 {offsets = [0, 2, 0], sizes = [8, 1, 64], strides = [1, 1, 1]} : vector<8x4x64xbf16> to vector<8x1x64xbf16>
    %64 = vector.shape_cast %63 : vector<8x1x64xbf16> to vector<8x64xbf16>
    %65 = vector.extract_strided_slice %58 {offsets = [0, 3, 0], sizes = [8, 1, 64], strides = [1, 1, 1]} : vector<8x4x64xbf16> to vector<8x1x64xbf16>
    %66 = vector.shape_cast %65 : vector<8x1x64xbf16> to vector<8x64xbf16>
    %67 = tpu.concatenate %60, %62, %64, %66 in 1 : vector<8x64xbf16>, vector<8x64xbf16>, vector<8x64xbf16>, vector<8x64xbf16> -> vector<8x256xbf16>
    %c0_20 = arith.constant 0 : index
    %c0_21 = arith.constant 0 : index
    %68 = vector.load %arg8[%c0_20, %c0_21] : memref<256x80xbf16, #tpu.memory_space<vmem>>, vector<256x80xbf16>
    %cst_22 = arith.constant dense<0.000000e+00> : vector<8x80xf32>
    %69 = tpu.matmul %67, %68, %cst_22 {dimension_numbers = #tpu.dot_dimension_numbers<[1], [0], [0], [1], [0, 0, 1, 1], [], []>} : vector<8x256xbf16>, vector<256x80xbf16>, vector<8x80xf32> -> vector<8x80xf32>
    %c0_23 = arith.constant 0 : index
    %c0_24 = arith.constant 0 : index
    %70 = vector.load %arg9[%c0_23, %c0_24] : memref<3x80xf32, #tpu.memory_space<vmem>>, vector<1x80xf32>
    %71 = vector.broadcast %70 : vector<1x80xf32> to vector<8x80xf32>
    %72 = arith.addf %69, %71 : vector<8x80xf32>
    %cst_25 = arith.constant 0.000000e+00 : f32
    %73 = vector.broadcast %cst_25 : f32 to vector<8x80xf32>
    %74 = arith.maximumf %72, %73 : vector<8x80xf32>
    %c1_26 = arith.constant 1 : index
    %c0_27 = arith.constant 0 : index
    %75 = vector.load %arg9[%c1_26, %c0_27] : memref<3x80xf32, #tpu.memory_space<vmem>>, vector<1x80xf32>
    %76 = vector.broadcast %75 : vector<1x80xf32> to vector<8x80xf32>
    %77 = arith.mulf %74, %76 : vector<8x80xf32>
    %c2 = arith.constant 2 : index
    %c0_28 = arith.constant 0 : index
    %78 = vector.load %arg9[%c2, %c0_28] : memref<3x80xf32, #tpu.memory_space<vmem>>, vector<1x80xf32>
    %79 = vector.broadcast %78 : vector<1x80xf32> to vector<8x80xf32>
    %80 = arith.addf %77, %79 : vector<8x80xf32>
    %81 = arith.truncf %80 : vector<8x80xf32> to vector<8x80xbf16>
    %c0_29 = arith.constant 0 : index
    %c0_30 = arith.constant 0 : index
    %82 = vector.load %arg10[%c0_29, %c0_30] : memref<80x10xbf16, #tpu.memory_space<vmem>>, vector<80x10xbf16>
    %cst_31 = arith.constant dense<0.000000e+00> : vector<8x10xf32>
    %83 = tpu.matmul %81, %82, %cst_31 {dimension_numbers = #tpu.dot_dimension_numbers<[1], [0], [0], [1], [0, 0, 1, 1], [], []>} : vector<8x80xbf16>, vector<80x10xbf16>, vector<8x10xf32> -> vector<8x10xf32>
    %c0_32 = arith.constant 0 : index
    %c0_33 = arith.constant 0 : index
    %84 = vector.load %arg11[%c0_32, %c0_33] : memref<1x10xf32, #tpu.memory_space<vmem>>, vector<1x10xf32>
    %85 = vector.broadcast %84 : vector<1x10xf32> to vector<8x10xf32>
    %86 = arith.addf %83, %85 : vector<8x10xf32>
    %c0_34 = arith.constant 0 : index
    %c0_35 = arith.constant 0 : index
    %87 = vector.load %arg12[%c0_34, %c0_35] : memref<8x10xf32, #tpu.memory_space<vmem>>, vector<8x10xf32>
    tpu.vector_store %arg12[%c0_34, %c0_35], %86 {strides = array<i32>} : memref<8x10xf32, #tpu.memory_space<vmem>>, vector<8x10xf32>,
    return
  }
  func.func @transform_0(%arg0: i32) -> (i32, i32, i32) {
    %c0_i32 = arith.constant 0 : i32
    %c0_i32_0 = arith.constant 0 : i32
    %c0_i32_1 = arith.constant 0 : i32
    return %arg0, %c0_i32, %c0_i32_0 : i32, i32, i32
  }
  func.func @transform_1(%arg0: i32) -> (i32, i32) {
    %c0_i32 = arith.constant 0 : i32
    %c0_i32_0 = arith.constant 0 : i32
    %c0_i32_1 = arith.constant 0 : i32
    return %c0_i32, %c0_i32_0 : i32, i32
  }
  func.func @transform_2(%arg0: i32) -> (i32, i32) {
    %c0_i32 = arith.constant 0 : i32
    %c0_i32_0 = arith.constant 0 : i32
    %c0_i32_1 = arith.constant 0 : i32
    return %c0_i32, %c0_i32_0 : i32, i32
  }
  func.func @transform_3(%arg0: i32) -> (i32, i32) {
    %c0_i32 = arith.constant 0 : i32
    %c0_i32_0 = arith.constant 0 : i32
    %c0_i32_1 = arith.constant 0 : i32
    return %c0_i32, %c0_i32_0 : i32, i32
  }
  func.func @transform_4(%arg0: i32) -> (i32, i32) {
    %c0_i32 = arith.constant 0 : i32
    %c0_i32_0 = arith.constant 0 : i32
    %c0_i32_1 = arith.constant 0 : i32
    return %c0_i32, %c0_i32_0 : i32, i32
  }
  func.func @transform_5(%arg0: i32) -> (i32, i32) {
    %c0_i32 = arith.constant 0 : i32
    %c0_i32_0 = arith.constant 0 : i32
    %c0_i32_1 = arith.constant 0 : i32
    return %c0_i32, %c0_i32_0 : i32, i32
  }
  func.func @transform_6(%arg0: i32) -> (i32, i32) {
    %c0_i32 = arith.constant 0 : i32
    %c0_i32_0 = arith.constant 0 : i32
    %c0_i32_1 = arith.constant 0 : i32
    return %c0_i32, %c0_i32_0 : i32, i32
  }
  func.func @transform_7(%arg0: i32) -> (i32, i32) {
    %c0_i32 = arith.constant 0 : i32
    %c0_i32_0 = arith.constant 0 : i32
    %c0_i32_1 = arith.constant 0 : i32
    return %c0_i32, %c0_i32_0 : i32, i32
  }
  func.func @transform_8(%arg0: i32) -> (i32, i32) {
    %c0_i32 = arith.constant 0 : i32
    %c0_i32_0 = arith.constant 0 : i32
    %c0_i32_1 = arith.constant 0 : i32
    return %c0_i32, %c0_i32_0 : i32, i32
  }
  func.func @transform_9(%arg0: i32) -> (i32, i32) {
    %c0_i32 = arith.constant 0 : i32
    %c0_i32_0 = arith.constant 0 : i32
    %c0_i32_1 = arith.constant 0 : i32
    return %c0_i32, %c0_i32_0 : i32, i32
  }
  func.func @transform_10(%arg0: i32) -> (i32, i32) {
    %c0_i32 = arith.constant 0 : i32
    %c0_i32_0 = arith.constant 0 : i32
    %c0_i32_1 = arith.constant 0 : i32
    return %c0_i32, %c0_i32_0 : i32, i32
  }
  func.func @transform_11(%arg0: i32) -> (i32, i32) {
    %c0_i32 = arith.constant 0 : i32
    %c0_i32_0 = arith.constant 0 : i32
    return %arg0, %c0_i32 : i32, i32
  }
}

</mosaic_0001>

<llo_original>
// kernel: fashion_forward.1
$region0: #{fashion_forward.1}
  #allocation0 [shape = 'u32[]', space=smem, size = 0x4, offset = 0x4, fixed_abs, tag = 'smem constant byte address 0x4 - core index']
  #allocation1 [shape = 'u32[144,128]{1,0:T(1,128)}', space=vmem, size = 0x12000, scoped, tag = 'internal scratch']
  %s0 = inlined_call_operand.vmem [shape: bf16[16,7,112], index: 0, kind: input, shape index: {}]
  %s1 = inlined_call_operand.vmem [shape: bf16[168,256], index: 1, kind: input, shape index: {}]
  %s2 = inlined_call_operand.vmem [shape: f32[1,256], index: 2, kind: input, shape index: {}]
  %s3 = inlined_call_operand.vmem [shape: f32[2,64], index: 3, kind: input, shape index: {}]
  %s4 = inlined_call_operand.vmem [shape: bf16[384,256], index: 4, kind: input, shape index: {}]
  %s5 = inlined_call_operand.vmem [shape: f32[1,256], index: 5, kind: input, shape index: {}]
  %s6 = inlined_call_operand.vmem [shape: f32[2,64], index: 6, kind: input, shape index: {}]
  %s7 = inlined_call_operand.vmem [shape: bf16[256,80], index: 7, kind: input, shape index: {}]
  %s8 = inlined_call_operand.vmem [shape: f32[3,80], index: 8, kind: input, shape index: {}]
  %s9 = inlined_call_operand.vmem [shape: bf16[80,10], index: 9, kind: input, shape index: {}]
  %s10 = inlined_call_operand.vmem [shape: f32[1,10], index: 10, kind: input, shape index: {}]
  %s11 = inlined_call_operand.hbm [shape: f32[16,10], index: 11, kind: output, shape index: {}]
  %s12 = sld [smem:[#allocation0]]
  $region77: #{fashion_forward.1} parent=0
    _
  %s14 = ssub.s32 1, %s12
  %s15 = scalar_select 0, %s14, %s12
  $region1: #{fashion_forward.1} parent=0
    #allocation2 [shape = 'u8[8192]{0}', space=vmem, size = 0x2000, scoped, tag = 'output window, operand 0']
    #allocation3 [shape = 's32[2]{0}', space=sflag, size = 0x8, scoped, tag = 'scoped memory for fashion_forward.1']
    %16 = vsyncpa [#allocation3], 0
    %s17 = scalar_lea.sflag [#allocation3], 1
    %18 = vsyncpa %s17, 0
    loop: start=0, step=1, limit=4
    $region2: #{fashion_forward.1} parent=1 // loop_pre_header
      _
    $region3: #{fashion_forward.1} parent=1 // loop_header
      %s20 = sphi 0, %s24
      %p21 = scmp.ge.s32.totalorder %s20, 4
      %s30 = sphi 0, %s32
      %s33 = sphi 0, %s30
      %s34 = sphi 0, %s33
      %s50 = sphi 0, %s34
      %s54 = sphi 0, %s54
      %s56 = sphi 0, %s54
      %s57 = sphi 0, %s56
      %s71 = sphi 0, %s57
      %s75 = sphi 0, %s75
      %s77 = sphi 0, %s75
      %s78 = sphi 0, %s77
      %s92 = sphi 0, %s78
      %s96 = sphi 0, %s96
      %s98 = sphi 0, %s96
      %s99 = sphi 0, %s98
      %s113 = sphi 0, %s99
      %s117 = sphi 0, %s117
      %s119 = sphi 0, %s117
      %s120 = sphi 0, %s119
      %s134 = sphi 0, %s120
      %s138 = sphi 0, %s138
      %s140 = sphi 0, %s138
      %s141 = sphi 0, %s140
      %s155 = sphi 0, %s141
      %s159 = sphi 0, %s159
      %s161 = sphi 0, %s159
      %s162 = sphi 0, %s161
      %s176 = sphi 0, %s162
      %s180 = sphi 0, %s180
      %s182 = sphi 0, %s180
      %s183 = sphi 0, %s182
      %s197 = sphi 0, %s183
      %s201 = sphi 0, %s201
      %s203 = sphi 0, %s201
      %s204 = sphi 0, %s203
      %s218 = sphi 0, %s204
      %s222 = sphi 0, %s222
      %s224 = sphi 0, %s222
      %s225 = sphi 0, %s224
      %s239 = sphi 0, %s225
      %s243 = sphi 0, %s243
      %s245 = sphi 0, %s243
      %s246 = sphi 0, %s245
      %s260 = sphi 0, %s246
      %s266 = sphi 0, %s268
      %s269 = sphi 0, %s266
      %s270 = sphi 0, %s269
      %s286 = sphi 0, %s270
    $region4: #{fashion_forward.1} parent=1 // loop_header_branch
      %23 = sbr.rel (%p21) target = $region8
    $region5: #{fashion_forward.1} parent=1 // loop_body
      %s25 = ssub.s32 %s20, 1
      %s26 = ssub.s32 %s20, 2
      %s27 = sadd.s32 %s20, 1
      %s28 = ssub.s32 %s20, %s27
      %p29 = scmp.eq.s32.totalorder %s28, 0
      %s31 = sadd.s32 %s30, 1
      %s32 = scalar_select %p29, %s30, %s31
      %p35 = pneg %p29
      %p36 = scmp.eq.s32.totalorder %s20, 1
      %p37 = por %p35, %p36
      %p38 = scmp.ne.s32.totalorder %s30, %s33
      %p39 = scmp.eq.s32.totalorder %s20, 0
      %p40 = por %p38, %p39
      %p41 = scmp.ne.s32.totalorder %s30, %s33
      %p42 = scmp.eq.s32.totalorder %s25, 1
      %p43 = por %p41, %p42
      %p44 = scmp.ne.s32.totalorder %s33, %s34
      %p45 = scmp.eq.s32.totalorder %s25, 0
      %p46 = por %p44, %p45
      %p47 = scmp.ne.s32.totalorder %s33, %s34
      %p48 = scmp.eq.s32.totalorder %s26, 1
      %p49 = por %p47, %p48
      %p51 = scmp.ne.s32.totalorder %s34, %s50
      %p52 = scmp.eq.s32.totalorder %s26, 0
      %p53 = por %p51, %p52
      %s55 = sadd.s32 %s54, 1
      %p58 = scmp.eq.s32.totalorder %s20, 1
      %p59 = scmp.ne.s32.totalorder %s54, %s56
      %p60 = scmp.eq.s32.totalorder %s20, 0
      %p61 = por %p59, %p60
      %p62 = scmp.ne.s32.totalorder %s54, %s56
      %p63 = scmp.eq.s32.totalorder %s25, 1
      %p64 = por %p62, %p63
      %p65 = scmp.ne.s32.totalorder %s56, %s57
      %p66 = scmp.eq.s32.totalorder %s25, 0
      %p67 = por %p65, %p66
      %p68 = scmp.ne.s32.totalorder %s56, %s57
      %p69 = scmp.eq.s32.totalorder %s26, 1
      %p70 = por %p68, %p69
      %p72 = scmp.ne.s32.totalorder %s57, %s71
      %p73 = scmp.eq.s32.totalorder %s26, 0
      %p74 = por %p72, %p73
      %s76 = sadd.s32 %s75, 1
      %p79 = scmp.eq.s32.totalorder %s20, 1
      %p80 = scmp.ne.s32.totalorder %s75, %s77
      %p81 = scmp.eq.s32.totalorder %s20, 0
      %p82 = por %p80, %p81
      %p83 = scmp.ne.s32.totalorder %s75, %s77
      %p84 = scmp.eq.s32.totalorder %s25, 1
      %p85 = por %p83, %p84
      %p86 = scmp.ne.s32.totalorder %s77, %s78
      %p87 = scmp.eq.s32.totalorder %s25, 0
      %p88 = por %p86, %p87
      %p89 = scmp.ne.s32.totalorder %s77, %s78
      %p90 = scmp.eq.s32.totalorder %s26, 1
      %p91 = por %p89, %p90
      %p93 = scmp.ne.s32.totalorder %s78, %s92
      %p94 = scmp.eq.s32.totalorder %s26, 0
      %p95 = por %p93, %p94
      %s97 = sadd.s32 %s96, 1
      %p100 = scmp.eq.s32.totalorder %s20, 1
      %p101 = scmp.ne.s32.totalorder %s96, %s98
      %p102 = scmp.eq.s32.totalorder %s20, 0
      %p103 = por %p101, %p102
      %p104 = scmp.ne.s32.totalorder %s96, %s98
      %p105 = scmp.eq.s32.totalorder %s25, 1
      %p106 = por %p104, %p105
      %p107 = scmp.ne.s32.totalorder %s98, %s99
      %p108 = scmp.eq.s32.totalorder %s25, 0
      %p109 = por %p107, %p108
      %p110 = scmp.ne.s32.totalorder %s98, %s99
      %p111 = scmp.eq.s32.totalorder %s26, 1
      %p112 = por %p110, %p111
      %p114 = scmp.ne.s32.totalorder %s99, %s113
      %p115 = scmp.eq.s32.totalorder %s26, 0
      %p116 = por %p114, %p115
      %s118 = sadd.s32 %s117, 1
      %p121 = scmp.eq.s32.totalorder %s20, 1
      %p122 = scmp.ne.s32.totalorder %s117, %s119
      %p123 = scmp.eq.s32.totalorder %s20, 0
      %p124 = por %p122, %p123
      %p125 = scmp.ne.s32.totalorder %s117, %s119
      %p126 = scmp.eq.s32.totalorder %s25, 1
      %p127 = por %p125, %p126
      %p128 = scmp.ne.s32.totalorder %s119, %s120
      %p129 = scmp.eq.s32.totalorder %s25, 0
      %p130 = por %p128, %p129
      %p131 = scmp.ne.s32.totalorder %s119, %s120
      %p132 = scmp.eq.s32.totalorder %s26, 1
      %p133 = por %p131, %p132
      %p135 = scmp.ne.s32.totalorder %s120, %s134
      %p136 = scmp.eq.s32.totalorder %s26, 0
      %p137 = por %p135, %p136
      %s139 = sadd.s32 %s138, 1
      %p142 = scmp.eq.s32.totalorder %s20, 1
      %p143 = scmp.ne.s32.totalorder %s138, %s140
      %p144 = scmp.eq.s32.totalorder %s20, 0
      %p145 = por %p143, %p144
      %p146 = scmp.ne.s32.totalorder %s138, %s140
      %p147 = scmp.eq.s32.totalorder %s25, 1
      %p148 = por %p146, %p147
      %p149 = scmp.ne.s32.totalorder %s140, %s141
      %p150 = scmp.eq.s32.totalorder %s25, 0
      %p151 = por %p149, %p150
      %p152 = scmp.ne.s32.totalorder %s140, %s141
      %p153 = scmp.eq.s32.totalorder %s26, 1
      %p154 = por %p152, %p153
      %p156 = scmp.ne.s32.totalorder %s141, %s155
      %p157 = scmp.eq.s32.totalorder %s26, 0
      %p158 = por %p156, %p157
      %s160 = sadd.s32 %s159, 1
      %p163 = scmp.eq.s32.totalorder %s20, 1
      %p164 = scmp.ne.s32.totalorder %s159, %s161
      %p165 = scmp.eq.s32.totalorder %s20, 0
      %p166 = por %p164, %p165
      %p167 = scmp.ne.s32.totalorder %s159, %s161
      %p168 = scmp.eq.s32.totalorder %s25, 1
      %p169 = por %p167, %p168
      %p170 = scmp.ne.s32.totalorder %s161, %s162
      %p171 = scmp.eq.s32.totalorder %s25, 0
      %p172 = por %p170, %p171
      %p173 = scmp.ne.s32.totalorder %s161, %s162
      %p174 = scmp.eq.s32.totalorder %s26, 1
      %p175 = por %p173, %p174
      %p177 = scmp.ne.s32.totalorder %s162, %s176
      %p178 = scmp.eq.s32.totalorder %s26, 0
      %p179 = por %p177, %p178
      %s181 = sadd.s32 %s180, 1
      %p184 = scmp.eq.s32.totalorder %s20, 1
      %p185 = scmp.ne.s32.totalorder %s180, %s182
      %p186 = scmp.eq.s32.totalorder %s20, 0
      %p187 = por %p185, %p186
      %p188 = scmp.ne.s32.totalorder %s180, %s182
      %p189 = scmp.eq.s32.totalorder %s25, 1
      %p190 = por %p188, %p189
      %p191 = scmp.ne.s32.totalorder %s182, %s183
      %p192 = scmp.eq.s32.totalorder %s25, 0
      %p193 = por %p191, %p192
      %p194 = scmp.ne.s32.totalorder %s182, %s183
      %p195 = scmp.eq.s32.totalorder %s26, 1
      %p196 = por %p194, %p195
      %p198 = scmp.ne.s32.totalorder %s183, %s197
      %p199 = scmp.eq.s32.totalorder %s26, 0
      %p200 = por %p198, %p199
      %s202 = sadd.s32 %s201, 1
      %p205 = scmp.eq.s32.totalorder %s20, 1
      %p206 = scmp.ne.s32.totalorder %s201, %s203
      %p207 = scmp.eq.s32.totalorder %s20, 0
      %p208 = por %p206, %p207
      %p209 = scmp.ne.s32.totalorder %s201, %s203
      %p210 = scmp.eq.s32.totalorder %s25, 1
      %p211 = por %p209, %p210
      %p212 = scmp.ne.s32.totalorder %s203, %s204
      %p213 = scmp.eq.s32.totalorder %s25, 0
      %p214 = por %p212, %p213
      %p215 = scmp.ne.s32.totalorder %s203, %s204
      %p216 = scmp.eq.s32.totalorder %s26, 1
      %p217 = por %p215, %p216
      %p219 = scmp.ne.s32.totalorder %s204, %s218
      %p220 = scmp.eq.s32.totalorder %s26, 0
      %p221 = por %p219, %p220
      %s223 = sadd.s32 %s222, 1
      %p226 = scmp.eq.s32.totalorder %s20, 1
      %p227 = scmp.ne.s32.totalorder %s222, %s224
      %p228 = scmp.eq.s32.totalorder %s20, 0
      %p229 = por %p227, %p228
      %p230 = scmp.ne.s32.totalorder %s222, %s224
      %p231 = scmp.eq.s32.totalorder %s25, 1
      %p232 = por %p230, %p231
      %p233 = scmp.ne.s32.totalorder %s224, %s225
      %p234 = scmp.eq.s32.totalorder %s25, 0
      %p235 = por %p233, %p234
      %p236 = scmp.ne.s32.totalorder %s224, %s225
      %p237 = scmp.eq.s32.totalorder %s26, 1
      %p238 = por %p236, %p237
      %p240 = scmp.ne.s32.totalorder %s225, %s239
      %p241 = scmp.eq.s32.totalorder %s26, 0
      %p242 = por %p240, %p241
      %s244 = sadd.s32 %s243, 1
      %p247 = scmp.eq.s32.totalorder %s20, 1
      %p248 = scmp.ne.s32.totalorder %s243, %s245
      %p249 = scmp.eq.s32.totalorder %s20, 0
      %p250 = por %p248, %p249
      %p251 = scmp.ne.s32.totalorder %s243, %s245
      %p252 = scmp.eq.s32.totalorder %s25, 1
      %p253 = por %p251, %p252
      %p254 = scmp.ne.s32.totalorder %s245, %s246
      %p255 = scmp.eq.s32.totalorder %s25, 0
      %p256 = por %p254, %p255
      %p257 = scmp.ne.s32.totalorder %s245, %s246
      %p258 = scmp.eq.s32.totalorder %s26, 1
      %p259 = por %p257, %p258
      %p261 = scmp.ne.s32.totalorder %s246, %s260
      %p262 = scmp.eq.s32.totalorder %s26, 0
      %p263 = por %p261, %p262
      %s264 = ssub.s32 %s20, %s27
      %p265 = scmp.eq.s32.totalorder %s264, 0
      %s267 = sadd.s32 %s266, 1
      %s268 = scalar_select %p265, %s266, %s267
      %p271 = pneg %p265
      %p272 = scmp.eq.s32.totalorder %s20, 1
      %p273 = por %p271, %p272
      %p274 = scmp.ne.s32.totalorder %s266, %s269
      %p275 = scmp.eq.s32.totalorder %s20, 0
      %p276 = por %p274, %p275
      %p277 = scmp.ne.s32.totalorder %s266, %s269
      %p278 = scmp.eq.s32.totalorder %s25, 1
      %p279 = por %p277, %p278
      %p280 = scmp.ne.s32.totalorder %s269, %s270
      %p281 = scmp.eq.s32.totalorder %s25, 0
      %p282 = por %p280, %p281
      %p283 = scmp.ne.s32.totalorder %s269, %s270
      %p284 = scmp.eq.s32.totalorder %s26, 1
      %p285 = por %p283, %p284
      %p287 = scmp.ne.s32.totalorder %s270, %s286
      %p288 = scmp.eq.s32.totalorder %s26, 0
      %p289 = por %p287, %p288
      %p290 = scmp.le.s32.totalorder 1, %s20
      %p291 = scmp.lt.s32.totalorder %s20, 3
      %p292 = pnand %p290, %p291
      %p293 = pneg %p292
      // Predicated region
      $region9: #{fashion_forward.1} parent=5 // pred_check
        _
      $region10: #{fashion_forward.1} parent=5 // pred_check_branch
        %295 = sbr.rel (%p292) target = $region12
      $region11: #{fashion_forward.1} parent=5 // pred_region
        %s296 = ssub.s32 %s20, 1
        // Predicated region
        $region13: #{fashion_forward.1} parent=11 // pred_check
          %p297 = pneg %p67
        $region14: #{fashion_forward.1} parent=11 // pred_check_branch
          %299 = sbr.rel (%p297) target = $region16
        $region15: #{fashion_forward.1} parent=11 // pred_region
          _
        $region16: #{fashion_forward.1} parent=11 // pred_fallthru
          _
        // Predicated region
        $region17: #{fashion_forward.1} parent=11 // pred_check
          %p300 = pneg %p88
        $region18: #{fashion_forward.1} parent=11 // pred_check_branch
          %302 = sbr.rel (%p300) target = $region20
        $region19: #{fashion_forward.1} parent=11 // pred_region
          _
        $region20: #{fashion_forward.1} parent=11 // pred_fallthru
          _
        // Predicated region
        $region21: #{fashion_forward.1} parent=11 // pred_check
          %p303 = pneg %p109
        $region22: #{fashion_forward.1} parent=11 // pred_check_branch
          %305 = sbr.rel (%p303) target = $region24
        $region23: #{fashion_forward.1} parent=11 // pred_region
          _
        $region24: #{fashion_forward.1} parent=11 // pred_fallthru
          _
        // Predicated region
        $region25: #{fashion_forward.1} parent=11 // pred_check
          %p306 = pneg %p130
        $region26: #{fashion_forward.1} parent=11 // pred_check_branch
          %308 = sbr.rel (%p306) target = $region28
        $region27: #{fashion_forward.1} parent=11 // pred_region
          _
        $region28: #{fashion_forward.1} parent=11 // pred_fallthru
          _
        // Predicated region
        $region29: #{fashion_forward.1} parent=11 // pred_check
          %p309 = pneg %p151
        $region30: #{fashion_forward.1} parent=11 // pred_check_branch
          %311 = sbr.rel (%p309) target = $region32
        $region31: #{fashion_forward.1} parent=11 // pred_region
          _
        $region32: #{fashion_forward.1} parent=11 // pred_fallthru
          _
        // Predicated region
        $region33: #{fashion_forward.1} parent=11 // pred_check
          %p312 = pneg %p172
        $region34: #{fashion_forward.1} parent=11 // pred_check_branch
          %314 = sbr.rel (%p312) target = $region36
        $region35: #{fashion_forward.1} parent=11 // pred_region
          _
        $region36: #{fashion_forward.1} parent=11 // pred_fallthru
          _
        // Predicated region
        $region37: #{fashion_forward.1} parent=11 // pred_check
          %p315 = pneg %p193
        $region38: #{fashion_forward.1} parent=11 // pred_check_branch
          %317 = sbr.rel (%p315) target = $region40
        $region39: #{fashion_forward.1} parent=11 // pred_region
          _
        $region40: #{fashion_forward.1} parent=11 // pred_fallthru
          _
        // Predicated region
        $region41: #{fashion_forward.1} parent=11 // pred_check
          %p318 = pneg %p214
        $region42: #{fashion_forward.1} parent=11 // pred_check_branch
          %320 = sbr.rel (%p318) target = $region44
        $region43: #{fashion_forward.1} parent=11 // pred_region
          _
        $region44: #{fashion_forward.1} parent=11 // pred_fallthru
          _
        // Predicated region
        $region45: #{fashion_forward.1} parent=11 // pred_check
          %p321 = pneg %p235
        $region46: #{fashion_forward.1} parent=11 // pred_check_branch
          %323 = sbr.rel (%p321) target = $region48
        $region47: #{fashion_forward.1} parent=11 // pred_region
          _
        $region48: #{fashion_forward.1} parent=11 // pred_fallthru
          _
        // Predicated region
        $region49: #{fashion_forward.1} parent=11 // pred_check
          %p324 = pneg %p256
        $region50: #{fashion_forward.1} parent=11 // pred_check_branch
          %326 = sbr.rel (%p324) target = $region52
        $region51: #{fashion_forward.1} parent=11 // pred_region
          _
        $region52: #{fashion_forward.1} parent=11 // pred_fallthru
          _
      $region12: #{fashion_forward.1} parent=5 // pred_fallthru
        _
      %p327 = scmp.lt.s32.totalorder %s20, 2
      // Predicated region
      $region53: #{fashion_forward.1} parent=5 // pred_check
        %p328 = pneg %p327
      $region54: #{fashion_forward.1} parent=5 // pred_check_branch
        %330 = sbr.rel (%p328) target = $region56
      $region55: #{fashion_forward.1} parent=5 // pred_region
        // Predicated region
        $region57: #{fashion_forward.1} parent=55 // pred_check
          %p331 = pneg %p40
        $region58: #{fashion_forward.1} parent=55 // pred_check_branch
          %333 = sbr.rel (%p331) target = $region60
        $region59: #{fashion_forward.1} parent=55 // pred_region
          %s334 = smul.u32 8, %s20
          %p335 = scmp.lt.s32.totalorder %s334, 15
          %s336 = scalar_select %p335, %s334, 15
          %s337 = smul.addr %s336, 4
          %s338 = scalar_lea.vmem %s0, %s337
          %s339 = smul.u32 8, %s20
        $region60: #{fashion_forward.1} parent=55 // pred_fallthru
          _
      $region56: #{fashion_forward.1} parent=5 // pred_fallthru
        _
      %p340 = scmp.le.s32.totalorder 1, %s20
      %p341 = scmp.lt.s32.totalorder %s20, 3
      %p342 = pnand %p340, %p341
      %p343 = pneg %p342
      // Predicated region
      $region61: #{fashion_forward.1} parent=5 // pred_check
        _
      $region62: #{fashion_forward.1} parent=5 // pred_check_branch
        %345 = sbr.rel (%p342) target = $region64
      $region63: #{fashion_forward.1} parent=5 // pred_region
        %s346 = ssub.s32 %s20, 1
        %s347 = smul.u32 8, %s25
        %p348 = scmp.lt.s32.totalorder %s347, 15
        %s349 = scalar_select %p348, %s347, 15
        %s350 = smul.addr %s349, 4
        %s351 = scalar_lea.vmem %s0, %s350
        %p352 = pneg %p46
        %p353 = pneg %p43
        %p354 = pneg %p67
        %p355 = pneg %p64
        %p356 = pneg %p88
        %p357 = pneg %p85
        %p358 = pneg %p109
        %p359 = pneg %p106
        %p360 = pneg %p130
        %p361 = pneg %p127
        %p362 = pneg %p151
        %p363 = pneg %p148
        %p364 = pneg %p172
        %p365 = pneg %p169
        %p366 = pneg %p193
        %p367 = pneg %p190
        %p368 = pneg %p214
        %p369 = pneg %p211
        %p370 = pneg %p235
        %p371 = pneg %p232
        %p372 = pneg %p256
        %p373 = pneg %p253
        %p374 = pneg %p282
        %p375 = pneg %p279
        %s376 = sand.u32 %s269, 1
        %s377 = scalar_lea.sflag [#allocation3], %s376
        %s378 = sand.u32 %s269, 1
        %s379 = smul.addr %s378, 8
        %s380 = scalar_lea.vmem [#allocation2], %s379
        %s381 = smul.u32 8, %s25
        %p382 = scmp.lt.s32.totalorder %s381, 15
        %s383 = scalar_select %p382, %s381, 15
        %s384 = smul.addr %s383, 4
        %s385 = scalar_lea.vmem %s0, %s384
        %s386 = smul.u32 8, %s25
        %v388 = vld [vmem:[%s385] sm:$0xf]
        %v389 = vld [vmem:[%s385 + $0x4] sm:$0xf]
        %v390 = vld [vmem:[%s385 + $0x8] sm:$0xf]
        %v391 = vld [vmem:[%s385 + $0xc] sm:$0xf]
        %v392 = vld [vmem:[%s385 + $0x10] sm:$0xf]
        %v393 = vld [vmem:[%s385 + $0x14] sm:$0xf]
        %v394 = vld [vmem:[%s385 + $0x18] sm:$0xf]
        %v395 = vld [vmem:[%s385 + $0x1c] sm:$0xf]
        %v404 = vunpack.c.l.b16 %v388
        %v405 = vunpack.c.l.b16 %v389
        %v406 = vunpack.c.l.b16 %v390
        %v407 = vunpack.c.l.b16 %v391
        %v408 = vunpack.c.l.b16 %v392
        %v409 = vunpack.c.l.b16 %v393
        %v410 = vunpack.c.l.b16 %v394
        %v411 = vunpack.c.l.b16 %v395
        %v412 = vpack.c.b16 %v404, %v404
        %v413 = vpack.c.b16 %v405, %v405
        %v414 = vpack.c.b16 %v406, %v406
        %v415 = vpack.c.b16 %v407, %v407
        %v416 = vpack.c.b16 %v408, %v408
        %v417 = vpack.c.b16 %v409, %v409
        %v418 = vpack.c.b16 %v410, %v410
        %v419 = vpack.c.b16 %v411, %v411
        %v421 = vshrl.u32 %v412, 16
        %v423 = vshll.u32 %v412, 16
        %v425 = vrot.slane %v423, 1
        %v426 = vor.u32 %v421, %v425
        %v428 = vshrl.u32 %v413, 16
        %v430 = vshll.u32 %v413, 16
        %v432 = vrot.slane %v430, 1
        %v433 = vor.u32 %v428, %v432
        %v435 = vshrl.u32 %v414, 16
        %v437 = vshll.u32 %v414, 16
        %v439 = vrot.slane %v437, 1
        %v440 = vor.u32 %v435, %v439
        %v442 = vshrl.u32 %v415, 16
        %v444 = vshll.u32 %v415, 16
        %v446 = vrot.slane %v444, 1
        %v447 = vor.u32 %v442, %v446
        %v449 = vshrl.u32 %v416, 16
        %v451 = vshll.u32 %v416, 16
        %v453 = vrot.slane %v451, 1
        %v454 = vor.u32 %v449, %v453
        %v456 = vshrl.u32 %v417, 16
        %v458 = vshll.u32 %v417, 16
        %v460 = vrot.slane %v458, 1
        %v461 = vor.u32 %v456, %v460
        %v463 = vshrl.u32 %v418, 16
        %v465 = vshll.u32 %v418, 16
        %v467 = vrot.slane %v465, 1
        %v468 = vor.u32 %v463, %v467
        %v470 = vshrl.u32 %v419, 16
        %v472 = vshll.u32 %v419, 16
        %v474 = vrot.slane %v472, 1
        %v475 = vor.u32 %v470, %v474
        %476 = vrot.lane.b32.xlu0 %v426, 112
        %v477 = vpop.permute.xlu0 %476
        %478 = vrot.lane.b32.xlu0 %v433, 112
        %v479 = vpop.permute.xlu0 %478
        %480 = vrot.lane.b32.xlu0 %v440, 112
        %v481 = vpop.permute.xlu0 %480
        %482 = vrot.lane.b32.xlu0 %v447, 112
        %v483 = vpop.permute.xlu0 %482
        %484 = vrot.lane.b32.xlu0 %v454, 112
        %v485 = vpop.permute.xlu0 %484
        %486 = vrot.lane.b32.xlu0 %v461, 112
        %v487 = vpop.permute.xlu0 %486
        %488 = vrot.lane.b32.xlu0 %v468, 112
        %v489 = vpop.permute.xlu0 %488
        %490 = vrot.lane.b32.xlu0 %v475, 112
        %v491 = vpop.permute.xlu0 %490
        %vm492 = vcmask 916480
        %v495 = vsel %vm492, %v388, %v477
        %v498 = vsel %vm492, %v389, %v479
        %v501 = vsel %vm492, %v390, %v481
        %v504 = vsel %vm492, %v391, %v483
        %v507 = vsel %vm492, %v392, %v485
        %v510 = vsel %vm492, %v393, %v487
        %v513 = vsel %vm492, %v394, %v489
        %v516 = vsel %vm492, %v395, %v491
        %517 = vrot.lane.b32.xlu0 %v412, 72
        %v518 = vpop.permute.xlu0 %517
        %519 = vrot.lane.b32.xlu0 %v413, 72
        %v520 = vpop.permute.xlu0 %519
        %521 = vrot.lane.b32.xlu0 %v414, 72
        %v522 = vpop.permute.xlu0 %521
        %523 = vrot.lane.b32.xlu0 %v415, 72
        %v524 = vpop.permute.xlu0 %523
        %525 = vrot.lane.b32.xlu0 %v416, 72
        %v526 = vpop.permute.xlu0 %525
        %527 = vrot.lane.b32.xlu0 %v417, 72
        %v528 = vpop.permute.xlu0 %527
        %529 = vrot.lane.b32.xlu0 %v418, 72
        %v530 = vpop.permute.xlu0 %529
        %531 = vrot.lane.b32.xlu0 %v419, 72
        %v532 = vpop.permute.xlu0 %531
        %533 = vrot.lane.b32.xlu0 %v426, 56
        %v534 = vpop.permute.xlu0 %533
        %535 = vrot.lane.b32.xlu0 %v433, 56
        %v536 = vpop.permute.xlu0 %535
        %537 = vrot.lane.b32.xlu0 %v440, 56
        %v538 = vpop.permute.xlu0 %537
        %539 = vrot.lane.b32.xlu0 %v447, 56
        %v540 = vpop.permute.xlu0 %539
        %541 = vrot.lane.b32.xlu0 %v454, 56
        %v542 = vpop.permute.xlu0 %541
        %543 = vrot.lane.b32.xlu0 %v461, 56
        %v544 = vpop.permute.xlu0 %543
        %545 = vrot.lane.b32.xlu0 %v468, 56
        %v546 = vpop.permute.xlu0 %545
        %547 = vrot.lane.b32.xlu0 %v475, 56
        %v548 = vpop.permute.xlu0 %547
        %vm549 = vcmask 457728
        %v552 = vsel %vm549, %v518, %v534
        %v555 = vsel %vm549, %v520, %v536
        %v558 = vsel %vm549, %v522, %v538
        %v561 = vsel %vm549, %v524, %v540
        %v564 = vsel %vm549, %v526, %v542
        %v567 = vsel %vm549, %v528, %v544
        %v570 = vsel %vm549, %v530, %v546
        %v573 = vsel %vm549, %v532, %v548
        %v582 = vrot.slane %v552, 5
        %v583 = vrot.slane %v534, 5
        %v584 = vrot.slane %v555, 5
        %v585 = vrot.slane %v536, 5
        %v586 = vrot.slane %v558, 5
        %v587 = vrot.slane %v538, 5
        %v588 = vrot.slane %v561, 5
        %v589 = vrot.slane %v540, 5
        %v590 = vrot.slane %v564, 5
        %v591 = vrot.slane %v542, 5
        %v592 = vrot.slane %v567, 5
        %v593 = vrot.slane %v544, 5
        %v594 = vrot.slane %v570, 5
        %v595 = vrot.slane %v546, 5
        %v596 = vrot.slane %v573, 5
        %v597 = vrot.slane %v548, 5
        %vm598 = vcmask 1042432
        %v600 = vsel %vm598, %v495, %v582
        %v602 = vsel %vm598, %v477, %v583
        %v604 = vsel %vm598, %v498, %v584
        %v606 = vsel %vm598, %v479, %v585
        %v608 = vsel %vm598, %v501, %v586
        %v610 = vsel %vm598, %v481, %v587
        %v612 = vsel %vm598, %v504, %v588
        %v614 = vsel %vm598, %v483, %v589
        %v616 = vsel %vm598, %v507, %v590
        %v618 = vsel %vm598, %v485, %v591
        %v620 = vsel %vm598, %v510, %v592
        %v622 = vsel %vm598, %v487, %v593
        %v624 = vsel %vm598, %v513, %v594
        %v626 = vsel %vm598, %v489, %v595
        %v628 = vsel %vm598, %v516, %v596
        %v630 = vsel %vm598, %v491, %v597
        %v647 = vcombine.low %v600, %v602
        %v648 = vcombine.high %v600, %v602
        %v650 = vunpack.c.l.s4 1983009808
        %v651 = vunpack.c.0.s8 %v650
        %v652 = vlaneseq
        %v653 = vshrl.u32 %v652, 7
        %v654 = vsub.s32 %v651, %v653
        %v655 = vrot.slane %v647, %v654
        %v657 = vunpack.c.l.s4 1983009808
        %v658 = vunpack.c.0.s8 %v657
        %v659 = vlaneseq
        %v660 = vshrl.u32 %v659, 7
        %v661 = vsub.s32 %v658, %v660
        %v662 = vrot.slane %v648, %v661
        %v663 = vcombine.high %v655, %v655
        %v664 = vcombine.low %v604, %v606
        %v665 = vcombine.high %v604, %v606
        %v667 = vunpack.c.l.s4 1983009808
        %v668 = vunpack.c.0.s8 %v667
        %v669 = vlaneseq
        %v670 = vshrl.u32 %v669, 7
        %v671 = vsub.s32 %v668, %v670
        %v672 = vrot.slane %v664, %v671
        %v674 = vunpack.c.l.s4 1983009808
        %v675 = vunpack.c.0.s8 %v674
        %v676 = vlaneseq
        %v677 = vshrl.u32 %v676, 7
        %v678 = vsub.s32 %v675, %v677
        %v679 = vrot.slane %v665, %v678
        %v680 = vcombine.high %v672, %v672
        %v681 = vcombine.low %v608, %v610
        %v682 = vcombine.high %v608, %v610
        %v684 = vunpack.c.l.s4 1983009808
        %v685 = vunpack.c.0.s8 %v684
        %v686 = vlaneseq
        %v687 = vshrl.u32 %v686, 7
        %v688 = vsub.s32 %v685, %v687
        %v689 = vrot.slane %v681, %v688
        %v691 = vunpack.c.l.s4 1983009808
        %v692 = vunpack.c.0.s8 %v691
        %v693 = vlaneseq
        %v694 = vshrl.u32 %v693, 7
        %v695 = vsub.s32 %v692, %v694
        %v696 = vrot.slane %v682, %v695
        %v697 = vcombine.high %v689, %v689
        %v698 = vcombine.low %v612, %v614
        %v699 = vcombine.high %v612, %v614
        %v701 = vunpack.c.l.s4 1983009808
        %v702 = vunpack.c.0.s8 %v701
        %v703 = vlaneseq
        %v704 = vshrl.u32 %v703, 7
        %v705 = vsub.s32 %v702, %v704
        %v706 = vrot.slane %v698, %v705
        %v708 = vunpack.c.l.s4 1983009808
        %v709 = vunpack.c.0.s8 %v708
        %v710 = vlaneseq
        %v711 = vshrl.u32 %v710, 7
        %v712 = vsub.s32 %v709, %v711
        %v713 = vrot.slane %v699, %v712
        %v714 = vcombine.high %v706, %v706
        %v715 = vcombine.low %v616, %v618
        %v716 = vcombine.high %v616, %v618
        %v718 = vunpack.c.l.s4 1983009808
        %v719 = vunpack.c.0.s8 %v718
        %v720 = vlaneseq
        %v721 = vshrl.u32 %v720, 7
        %v722 = vsub.s32 %v719, %v721
        %v723 = vrot.slane %v715, %v722
        %v725 = vunpack.c.l.s4 1983009808
        %v726 = vunpack.c.0.s8 %v725
        %v727 = vlaneseq
        %v728 = vshrl.u32 %v727, 7
        %v729 = vsub.s32 %v726, %v728
        %v730 = vrot.slane %v716, %v729
        %v731 = vcombine.high %v723, %v723
        %v732 = vcombine.low %v620, %v622
        %v733 = vcombine.high %v620, %v622
        %v735 = vunpack.c.l.s4 1983009808
        %v736 = vunpack.c.0.s8 %v735
        %v737 = vlaneseq
        %v738 = vshrl.u32 %v737, 7
        %v739 = vsub.s32 %v736, %v738
        %v740 = vrot.slane %v732, %v739
        %v742 = vunpack.c.l.s4 1983009808
        %v743 = vunpack.c.0.s8 %v742
        %v744 = vlaneseq
        %v745 = vshrl.u32 %v744, 7
        %v746 = vsub.s32 %v743, %v745
        %v747 = vrot.slane %v733, %v746
        %v748 = vcombine.high %v740, %v740
        %v749 = vcombine.low %v624, %v626
        %v750 = vcombine.high %v624, %v626
        %v752 = vunpack.c.l.s4 1983009808
        %v753 = vunpack.c.0.s8 %v752
        %v754 = vlaneseq
        %v755 = vshrl.u32 %v754, 7
        %v756 = vsub.s32 %v753, %v755
        %v757 = vrot.slane %v749, %v756
        %v759 = vunpack.c.l.s4 1983009808
        %v760 = vunpack.c.0.s8 %v759
        %v761 = vlaneseq
        %v762 = vshrl.u32 %v761, 7
        %v763 = vsub.s32 %v760, %v762
        %v764 = vrot.slane %v750, %v763
        %v765 = vcombine.high %v757, %v757
        %v766 = vcombine.low %v628, %v630
        %v767 = vcombine.high %v628, %v630
        %v769 = vunpack.c.l.s4 1983009808
        %v770 = vunpack.c.0.s8 %v769
        %v771 = vlaneseq
        %v772 = vshrl.u32 %v771, 7
        %v773 = vsub.s32 %v770, %v772
        %v774 = vrot.slane %v766, %v773
        %v776 = vunpack.c.l.s4 1983009808
        %v777 = vunpack.c.0.s8 %v776
        %v778 = vlaneseq
        %v779 = vshrl.u32 %v778, 7
        %v780 = vsub.s32 %v777, %v779
        %v781 = vrot.slane %v767, %v780
        %v782 = vcombine.high %v774, %v774
        %v783 = vld [vmem:[%s1] sm:$0xff]
        %v784 = vld [vmem:[%s1 + $0x8] sm:$0xff]
        %v785 = vld [vmem:[%s1 + $0x10] sm:$0xff]
        %v786 = vld [vmem:[%s1 + $0x18] sm:$0xff]
        %v787 = vld [vmem:[%s1 + $0x20] sm:$0xff]
        %v788 = vld [vmem:[%s1 + $0x28] sm:$0xff]
        %v789 = vld [vmem:[%s1 + $0x30] sm:$0xff]
        %v790 = vld [vmem:[%s1 + $0x38] sm:$0xff]
        %v791 = vld [vmem:[%s1 + $0x40] sm:$0xff]
        %v792 = vld [vmem:[%s1 + $0x48] sm:$0xff]
        %v793 = vld [vmem:[%s1 + $0x50] sm:$0xff]
        %v794 = vld [vmem:[%s1 + $0x58] sm:$0xff]
        %v795 = vld [vmem:[%s1 + $0x60] sm:$0xff]
        %v796 = vld [vmem:[%s1 + $0x68] sm:$0xff]
        %v797 = vld [vmem:[%s1 + $0x70] sm:$0xff]
        %v798 = vld [vmem:[%s1 + $0x78] sm:$0xff]
        %v799 = vld [vmem:[%s1 + $0x80] sm:$0xff]
        %v800 = vld [vmem:[%s1 + $0x88] sm:$0xff]
        %v801 = vld [vmem:[%s1 + $0x90] sm:$0xff]
        %v802 = vld [vmem:[%s1 + $0x98] sm:$0xff]
        %v803 = vld [vmem:[%s1 + $0xa0] sm:$0xff]
        %v804 = vld [vmem:[%s2] sm:$0x3]
        %v806 = vlaneseq
        %v807 = vshrl.u32 %v806, 7
        %v808 = vsub.s32 0, %v807
        %v809 = vrot.slane %v804, %v808
        %v810 = vlaneseq
        %v811 = vshrl.u32 %v810, 7
        %v812 = vsub.s32 1, %v811
        %v813 = vrot.slane %v804, %v812
        %v816 = vcombine.low %v655, %v663
        %v817 = vcombine.low %v662, %v672
        %v819 = vunpack.c.l.s4 1983009808
        %v820 = vunpack.c.0.s8 %v819
        %v821 = vlaneseq
        %v822 = vshrl.u32 %v821, 7
        %v823 = vsub.s32 %v820, %v822
        %v824 = vrot.slane %v816, %v823
        %v826 = vunpack.c.l.s4 1983009808
        %v827 = vunpack.c.0.s8 %v826
        %v828 = vlaneseq
        %v829 = vshrl.u32 %v828, 7
        %v830 = vsub.s32 %v827, %v829
        %v831 = vrot.slane %v817, %v830
        %v832 = vcombine.low %v824, %v831
        %v833 = vcombine.high %v824, %v831
        %v834 = vcombine.low %v680, %v679
        %v835 = vcombine.low %v689, %v697
        %v837 = vunpack.c.l.s4 1983009808
        %v838 = vunpack.c.0.s8 %v837
        %v839 = vlaneseq
        %v840 = vshrl.u32 %v839, 7
        %v841 = vsub.s32 %v838, %v840
        %v842 = vrot.slane %v834, %v841
        %v844 = vunpack.c.l.s4 1983009808
        %v845 = vunpack.c.0.s8 %v844
        %v846 = vlaneseq
        %v847 = vshrl.u32 %v846, 7
        %v848 = vsub.s32 %v845, %v847
        %v849 = vrot.slane %v835, %v848
        %v850 = vcombine.low %v842, %v849
        %v851 = vcombine.high %v842, %v849
        %v852 = vcombine.low %v696, %v706
        %v853 = vcombine.low %v714, %v713
        %v855 = vunpack.c.l.s4 1983009808
        %v856 = vunpack.c.0.s8 %v855
        %v857 = vlaneseq
        %v858 = vshrl.u32 %v857, 7
        %v859 = vsub.s32 %v856, %v858
        %v860 = vrot.slane %v852, %v859
        %v862 = vunpack.c.l.s4 1983009808
        %v863 = vunpack.c.0.s8 %v862
        %v864 = vlaneseq
        %v865 = vshrl.u32 %v864, 7
        %v866 = vsub.s32 %v863, %v865
        %v867 = vrot.slane %v853, %v866
        %v868 = vcombine.low %v860, %v867
        %v869 = vcombine.high %v860, %v867
        %v870 = vcombine.low %v723, %v731
        %v871 = vcombine.low %v730, %v740
        %v873 = vunpack.c.l.s4 1983009808
        %v874 = vunpack.c.0.s8 %v873
        %v875 = vlaneseq
        %v876 = vshrl.u32 %v875, 7
        %v877 = vsub.s32 %v874, %v876
        %v878 = vrot.slane %v870, %v877
        %v880 = vunpack.c.l.s4 1983009808
        %v881 = vunpack.c.0.s8 %v880
        %v882 = vlaneseq
        %v883 = vshrl.u32 %v882, 7
        %v884 = vsub.s32 %v881, %v883
        %v885 = vrot.slane %v871, %v884
        %v886 = vcombine.low %v878, %v885
        %v887 = vcombine.high %v878, %v885
        %v888 = vcombine.low %v748, %v747
        %v889 = vcombine.low %v757, %v765
        %v891 = vunpack.c.l.s4 1983009808
        %v892 = vunpack.c.0.s8 %v891
        %v893 = vlaneseq
        %v894 = vshrl.u32 %v893, 7
        %v895 = vsub.s32 %v892, %v894
        %v896 = vrot.slane %v888, %v895
        %v898 = vunpack.c.l.s4 1983009808
        %v899 = vunpack.c.0.s8 %v898
        %v900 = vlaneseq
        %v901 = vshrl.u32 %v900, 7
        %v902 = vsub.s32 %v899, %v901
        %v903 = vrot.slane %v889, %v902
        %v904 = vcombine.low %v896, %v903
        %v905 = vcombine.high %v896, %v903
        %v906 = vcombine.low %v764, %v774
        %v907 = vcombine.low %v782, %v781
        %v909 = vunpack.c.l.s4 1983009808
        %v910 = vunpack.c.0.s8 %v909
        %v911 = vlaneseq
        %v912 = vshrl.u32 %v911, 7
        %v913 = vsub.s32 %v910, %v912
        %v914 = vrot.slane %v906, %v913
        %v916 = vunpack.c.l.s4 1983009808
        %v917 = vunpack.c.0.s8 %v916
        %v918 = vlaneseq
        %v919 = vshrl.u32 %v918, 7
        %v920 = vsub.s32 %v917, %v919
        %v921 = vrot.slane %v907, %v920
        %v922 = vcombine.low %v914, %v921
        %v923 = vcombine.high %v914, %v921
        %v951 = vunpack.c.l.b16 %v783
        %v952 = vunpack.c.h.b16 %v783
        %v953 = vunpack.c.l.b16 %v784
        %v954 = vunpack.c.h.b16 %v784
        %v955 = vunpack.c.l.b16 %v785
        %v956 = vunpack.c.h.b16 %v785
        %v957 = vunpack.c.l.b16 %v786
        %v958 = vunpack.c.h.b16 %v786
        %v959 = vunpack.c.l.b16 %v787
        %v960 = vunpack.c.h.b16 %v787
        %v961 = vunpack.c.l.b16 %v788
        %v962 = vunpack.c.h.b16 %v788
        %v963 = vunpack.c.l.b16 %v789
        %v964 = vunpack.c.h.b16 %v789
        %v965 = vunpack.c.l.b16 %v790
        %v966 = vunpack.c.h.b16 %v790
        %v967 = vunpack.c.l.b16 %v791
        %v968 = vunpack.c.h.b16 %v791
        %v969 = vunpack.c.l.b16 %v792
        %v970 = vunpack.c.h.b16 %v792
        %v971 = vunpack.c.l.b16 %v793
        %v972 = vunpack.c.h.b16 %v793
        %v973 = vunpack.c.l.b16 %v794
        %v974 = vunpack.c.h.b16 %v794
        %v975 = vunpack.c.l.b16 %v795
        %v976 = vunpack.c.h.b16 %v795
        %v977 = vunpack.c.l.b16 %v796
        %v978 = vunpack.c.h.b16 %v796
        %v979 = vunpack.c.l.b16 %v797
        %v980 = vunpack.c.h.b16 %v797
        %v981 = vunpack.c.l.b16 %v798
        %v982 = vunpack.c.h.b16 %v798
        %v983 = vunpack.c.l.b16 %v799
        %v984 = vunpack.c.h.b16 %v799
        %v985 = vunpack.c.l.b16 %v800
        %v986 = vunpack.c.h.b16 %v800
        %v987 = vunpack.c.l.b16 %v801
        %v988 = vunpack.c.h.b16 %v801
        %v989 = vunpack.c.l.b16 %v802
        %v990 = vunpack.c.h.b16 %v802
        %v991 = vunpack.c.l.b16 %v803
        %v992 = vunpack.c.h.b16 %v803
        %v993 = vpack.c.b16 %v953, %v951
        %v994 = vpack.c.b16 %v954, %v952
        %v995 = vpack.c.b16 %v957, %v955
        %v996 = vpack.c.b16 %v958, %v956
        %v997 = vpack.c.b16 %v961, %v959
        %v998 = vpack.c.b16 %v962, %v960
        %v999 = vpack.c.b16 %v965, %v963
        %v1000 = vpack.c.b16 %v966, %v964
        %v1001 = vpack.c.b16 %v969, %v967
        %v1002 = vpack.c.b16 %v970, %v968
        %v1003 = vpack.c.b16 %v973, %v971
        %v1004 = vpack.c.b16 %v974, %v972
        %v1005 = vpack.c.b16 %v977, %v975
        %v1006 = vpack.c.b16 %v978, %v976
        %v1007 = vpack.c.b16 %v981, %v979
        %v1008 = vpack.c.b16 %v982, %v980
        %v1009 = vpack.c.b16 %v985, %v983
        %v1010 = vpack.c.b16 %v986, %v984
        %v1011 = vpack.c.b16 %v989, %v987
        %v1012 = vpack.c.b16 %v990, %v988
        %v1013 = vpack.c.b16 %v991, %v991
        %v1014 = vpack.c.b16 %v992, %v992
        %vm1035 = vcmask 326656
        %v1037 = vsel %vm1035, %v833, 0
        %v1040 = vsel %vm1035, %v851, 0
        %v1043 = vsel %vm1035, %v869, 0
        %v1046 = vsel %vm1035, %v887, 0
        %v1049 = vsel %vm1035, %v905, 0
        %v1052 = vsel %vm1035, %v923, 0
        %vm1054 = vcmask 1043456
        %v1056 = vsel %vm1054, %v1013, 0
        %v1059 = vsel %vm1054, %v1014, 0
        %1061 = vmatprep.subr.bf16.mxu0 %v1008
        %1062 = vmatpush1.bf16.msra.mxu0 %v1007
        %1063 = vmatprep.subr.bf16.mxu0 %v1006
        %1064 = vmatpush1.bf16.msra.mxu0 %v1005
        %1065 = vmatprep.subr.bf16.mxu0 %v1004
        %1066 = vmatpush1.bf16.msra.mxu0 %v1003
        %1067 = vmatprep.subr.bf16.mxu0 %v1002
        %1068 = vmatpush1.bf16.msra.mxu0 %v1001
        %1069 = vmatprep.subr.bf16.mxu0 %v1000
        %1070 = vmatpush1.bf16.msra.mxu0 %v999
        %1071 = vmatprep.subr.bf16.mxu0 %v998
        %1072 = vmatpush1.bf16.msra.mxu0 %v997
        %1073 = vmatprep.subr.bf16.mxu0 %v996
        %1074 = vmatpush1.bf16.msra.mxu0 %v995
        %1075 = vmatprep.subr.bf16.mxu0 %v994
        %1076 = vmatpush1.bf16.msra.mxu0 %v993
        %1077 = vmatprep.subr.bf16.mxu0 0
        %1078 = vmatpush2.bf16.msra.mxu0 0
        %1079 = vmatprep.subr.bf16.mxu0 0
        %1080 = vmatpush2.bf16.msra.mxu0 0
        %1081 = vmatprep.subr.bf16.mxu0 0
        %1082 = vmatpush2.bf16.msra.mxu0 0
        %1083 = vmatprep.subr.bf16.mxu0 0
        %1084 = vmatpush2.bf16.msra.mxu0 0
        %1085 = vmatprep.subr.bf16.mxu0 0
        %1086 = vmatpush2.bf16.msra.mxu0 0
        %1087 = vmatprep.subr.bf16.mxu0 %v1059
        %1088 = vmatpush2.bf16.msra.mxu0 %v1056
        %1089 = vmatprep.subr.bf16.mxu0 %v1012
        %1090 = vmatpush2.bf16.msra.mxu0 %v1011
        %1091 = vmatprep.subr.bf16.mxu0 %v1010
        %1092 = vmatpush2.bf16.msra.mxu0 %v1009
        %1093 = vmatprep.mubr.bf16.mxu0 %v1037
        %1094 = vmatmul.mubr.bf16.gmra.mxu0 %v832
        %v1095 = vpop.f32.mrf.mxu0
        %v1096 = vadd.f32 %v809, %v1095
        %v1097 = vpop.f32.mrf.mxu0
        %v1098 = vadd.f32 %v813, %v1097
        %v1099 = vpop.f32.mrf.mxu0
        %v1100 = vadd.f32 %v809, %v1099
        %v1101 = vpop.f32.mrf.mxu0
        %v1102 = vadd.f32 %v813, %v1101
        %1103 = vmatprep.mubr.bf16.mxu0 %v1040
        %1104 = vmatmul.mubr.bf16.gmra.mxu0 %v850
        %v1105 = vpop.f32.mrf.mxu0
        %v1106 = vadd.f32 %v809, %v1105
        %v1107 = vpop.f32.mrf.mxu0
        %v1108 = vadd.f32 %v813, %v1107
        %v1109 = vpop.f32.mrf.mxu0
        %v1110 = vadd.f32 %v809, %v1109
        %v1111 = vpop.f32.mrf.mxu0
        %v1112 = vadd.f32 %v813, %v1111
        %1113 = vmatprep.mubr.bf16.mxu0 %v1043
        %1114 = vmatmul.mubr.bf16.gmra.mxu0 %v868
        %v1115 = vpop.f32.mrf.mxu0
        %v1116 = vadd.f32 %v809, %v1115
        %v1117 = vpop.f32.mrf.mxu0
        %v1118 = vadd.f32 %v813, %v1117
        %v1119 = vpop.f32.mrf.mxu0
        %v1120 = vadd.f32 %v809, %v1119
        %v1121 = vpop.f32.mrf.mxu0
        %v1122 = vadd.f32 %v813, %v1121
        %1123 = vmatprep.mubr.bf16.mxu0 %v1046
        %1124 = vmatmul.mubr.bf16.gmra.mxu0 %v886
        %v1125 = vpop.f32.mrf.mxu0
        %v1126 = vadd.f32 %v809, %v1125
        %v1127 = vpop.f32.mrf.mxu0
        %v1128 = vadd.f32 %v813, %v1127
        %v1129 = vpop.f32.mrf.mxu0
        %v1130 = vadd.f32 %v809, %v1129
        %v1131 = vpop.f32.mrf.mxu0
        %v1132 = vadd.f32 %v813, %v1131
        %1133 = vmatprep.mubr.bf16.mxu0 %v1049
        %1134 = vmatmul.mubr.bf16.gmra.mxu0 %v904
        %v1135 = vpop.f32.mrf.mxu0
        %v1136 = vadd.f32 %v809, %v1135
        %v1137 = vpop.f32.mrf.mxu0
        %v1138 = vadd.f32 %v813, %v1137
        %v1139 = vpop.f32.mrf.mxu0
        %v1140 = vadd.f32 %v809, %v1139
        %v1141 = vpop.f32.mrf.mxu0
        %v1142 = vadd.f32 %v813, %v1141
        %1143 = vmatprep.mubr.bf16.mxu0 %v1052
        %1144 = vmatmul.mubr.bf16.gmra.mxu0 %v922
        %v1145 = vpop.f32.mrf.mxu0
        %v1146 = vadd.f32 %v809, %v1145
        %v1147 = vpop.f32.mrf.mxu0
        %v1148 = vadd.f32 %v813, %v1147
        %v1149 = vpop.f32.mrf.mxu0
        %v1150 = vadd.f32 %v809, %v1149
        %v1151 = vpop.f32.mrf.mxu0
        %v1152 = vadd.f32 %v813, %v1151
        %1153 = vdwg.mxu0
        %v1154 = vmax.f32 %v1096, 0.0
        %v1155 = vmax.f32 %v1098, 0.0
        %v1156 = vmax.f32 %v1100, 0.0
        %v1157 = vmax.f32 %v1102, 0.0
        %v1158 = vmax.f32 %v1106, 0.0
        %v1159 = vmax.f32 %v1108, 0.0
        %v1160 = vmax.f32 %v1110, 0.0
        %v1161 = vmax.f32 %v1112, 0.0
        %v1162 = vmax.f32 %v1116, 0.0
        %v1163 = vmax.f32 %v1118, 0.0
        %v1164 = vmax.f32 %v1120, 0.0
        %v1165 = vmax.f32 %v1122, 0.0
        %v1166 = vmax.f32 %v1126, 0.0
        %v1167 = vmax.f32 %v1128, 0.0
        %v1168 = vmax.f32 %v1130, 0.0
        %v1169 = vmax.f32 %v1132, 0.0
        %v1170 = vmax.f32 %v1136, 0.0
        %v1171 = vmax.f32 %v1138, 0.0
        %v1172 = vmax.f32 %v1140, 0.0
        %v1173 = vmax.f32 %v1142, 0.0
        %v1174 = vmax.f32 %v1146, 0.0
        %v1175 = vmax.f32 %v1148, 0.0
        %v1176 = vmax.f32 %v1150, 0.0
        %v1177 = vmax.f32 %v1152, 0.0
        %v1178 = vmax.f32 %v1154, %v1155
        %v1179 = vmax.f32 %v1156, %v1157
        %v1180 = vmax.f32 %v1158, %v1159
        %v1181 = vmax.f32 %v1160, %v1161
        %v1182 = vmax.f32 %v1162, %v1163
        %v1183 = vmax.f32 %v1164, %v1165
        %v1184 = vmax.f32 %v1166, %v1167
        %v1185 = vmax.f32 %v1168, %v1169
        %v1186 = vmax.f32 %v1170, %v1171
        %v1187 = vmax.f32 %v1172, %v1173
        %v1188 = vmax.f32 %v1174, %v1175
        %v1189 = vmax.f32 %v1176, %v1177
        %1202 = vrot.lane.b32.xlu0 %v1178, 64
        %v1203 = vpop.permute.xlu0 %1202
        %1204 = vrot.lane.b32.xlu0 %v1179, 64
        %v1205 = vpop.permute.xlu0 %1204
        %1206 = vrot.lane.b32.xlu0 %v1180, 64
        %v1207 = vpop.permute.xlu0 %1206
        %1208 = vrot.lane.b32.xlu0 %v1181, 64
        %v1209 = vpop.permute.xlu0 %1208
        %1210 = vrot.lane.b32.xlu0 %v1182, 64
        %v1211 = vpop.permute.xlu0 %1210
        %1212 = vrot.lane.b32.xlu0 %v1183, 64
        %v1213 = vpop.permute.xlu0 %1212
        %1214 = vrot.lane.b32.xlu0 %v1184, 64
        %v1215 = vpop.permute.xlu0 %1214
        %1216 = vrot.lane.b32.xlu0 %v1185, 64
        %v1217 = vpop.permute.xlu0 %1216
        %1218 = vrot.lane.b32.xlu0 %v1186, 64
        %v1219 = vpop.permute.xlu0 %1218
        %1220 = vrot.lane.b32.xlu0 %v1187, 64
        %v1221 = vpop.permute.xlu0 %1220
        %1222 = vrot.lane.b32.xlu0 %v1188, 64
        %v1223 = vpop.permute.xlu0 %1222
        %1224 = vrot.lane.b32.xlu0 %v1189, 64
        %v1225 = vpop.permute.xlu0 %1224
        %v1238 = vmax.f32 %v1178, %v1203
        %v1239 = vmax.f32 %v1179, %v1205
        %v1240 = vmax.f32 %v1180, %v1207
        %v1241 = vmax.f32 %v1181, %v1209
        %v1242 = vmax.f32 %v1182, %v1211
        %v1243 = vmax.f32 %v1183, %v1213
        %v1244 = vmax.f32 %v1184, %v1215
        %v1245 = vmax.f32 %v1185, %v1217
        %v1246 = vmax.f32 %v1186, %v1219
        %v1247 = vmax.f32 %v1187, %v1221
        %v1248 = vmax.f32 %v1188, %v1223
        %v1249 = vmax.f32 %v1189, %v1225
        %v1250 = vld [vmem:[%s3] sm:$0x1]
        %v1251 = vlaneseq
        %v1252 = vshrl.u32 %v1251, 7
        %v1253 = vsub.s32 0, %v1252
        %v1254 = vrot.slane %v1250, %v1253
        %v1255 = vmul.f32 %v1238, %v1254
        %v1256 = vmul.f32 %v1239, %v1254
        %v1257 = vmul.f32 %v1240, %v1254
        %v1258 = vmul.f32 %v1241, %v1254
        %v1259 = vmul.f32 %v1242, %v1254
        %v1260 = vmul.f32 %v1243, %v1254
        %v1261 = vmul.f32 %v1244, %v1254
        %v1262 = vmul.f32 %v1245, %v1254
        %v1263 = vmul.f32 %v1246, %v1254
        %v1264 = vmul.f32 %v1247, %v1254
        %v1265 = vmul.f32 %v1248, %v1254
        %v1266 = vmul.f32 %v1249, %v1254
        %v1267 = vld [vmem:[%s3 + $0x1] sm:$0x1]
        %v1268 = vlaneseq
        %v1269 = vshrl.u32 %v1268, 7
        %v1270 = vsub.s32 0, %v1269
        %v1271 = vrot.slane %v1267, %v1270
        %v1272 = vadd.f32 %v1255, %v1271
        %v1273 = vadd.f32 %v1256, %v1271
        %v1274 = vadd.f32 %v1257, %v1271
        %v1275 = vadd.f32 %v1258, %v1271
        %v1276 = vadd.f32 %v1259, %v1271
        %v1277 = vadd.f32 %v1260, %v1271
        %v1278 = vadd.f32 %v1261, %v1271
        %v1279 = vadd.f32 %v1262, %v1271
        %v1280 = vadd.f32 %v1263, %v1271
        %v1281 = vadd.f32 %v1264, %v1271
        %v1282 = vadd.f32 %v1265, %v1271
        %v1283 = vadd.f32 %v1266, %v1271
        %v1284 = vpack.c.bf16 %v1273, %v1272
        %v1285 = vpack.c.bf16 %v1275, %v1274
        %v1286 = vpack.c.bf16 %v1277, %v1276
        %v1287 = vpack.c.bf16 %v1279, %v1278
        %v1288 = vpack.c.bf16 %v1281, %v1280
        %v1289 = vpack.c.bf16 %v1283, %v1282
        %v1296 = vcombine.high %v1284, %v1284
        %v1298 = vunpack.c.l.s4 1983009808
        %v1299 = vunpack.c.0.s8 %v1298
        %v1300 = vlaneseq
        %v1301 = vshrl.u32 %v1300, 7
        %v1302 = vsub.s32 %v1299, %v1301
        %v1303 = vrot.slane %v1284, %v1302
        %v1305 = vunpack.c.l.s4 1983009808
        %v1306 = vunpack.c.0.s8 %v1305
        %v1307 = vlaneseq
        %v1308 = vshrl.u32 %v1307, 7
        %v1309 = vsub.s32 %v1306, %v1308
        %v1310 = vrot.slane %v1296, %v1309
        %v1311 = vcombine.high %v1303, %v1303
        %v1312 = vcombine.high %v1310, %v1310
        %v1313 = vcombine.high %v1285, %v1285
        %v1315 = vunpack.c.l.s4 1983009808
        %v1316 = vunpack.c.0.s8 %v1315
        %v1317 = vlaneseq
        %v1318 = vshrl.u32 %v1317, 7
        %v1319 = vsub.s32 %v1316, %v1318
        %v1320 = vrot.slane %v1285, %v1319
        %v1322 = vunpack.c.l.s4 1983009808
        %v1323 = vunpack.c.0.s8 %v1322
        %v1324 = vlaneseq
        %v1325 = vshrl.u32 %v1324, 7
        %v1326 = vsub.s32 %v1323, %v1325
        %v1327 = vrot.slane %v1313, %v1326
        %v1328 = vcombine.high %v1320, %v1320
        %v1329 = vcombine.high %v1327, %v1327
        %v1330 = vcombine.high %v1286, %v1286
        %v1332 = vunpack.c.l.s4 1983009808
        %v1333 = vunpack.c.0.s8 %v1332
        %v1334 = vlaneseq
        %v1335 = vshrl.u32 %v1334, 7
        %v1336 = vsub.s32 %v1333, %v1335
        %v1337 = vrot.slane %v1286, %v1336
        %v1339 = vunpack.c.l.s4 1983009808
        %v1340 = vunpack.c.0.s8 %v1339
        %v1341 = vlaneseq
        %v1342 = vshrl.u32 %v1341, 7
        %v1343 = vsub.s32 %v1340, %v1342
        %v1344 = vrot.slane %v1330, %v1343
        %v1345 = vcombine.high %v1337, %v1337
        %v1346 = vcombine.high %v1344, %v1344
        %v1347 = vcombine.high %v1287, %v1287
        %v1349 = vunpack.c.l.s4 1983009808
        %v1350 = vunpack.c.0.s8 %v1349
        %v1351 = vlaneseq
        %v1352 = vshrl.u32 %v1351, 7
        %v1353 = vsub.s32 %v1350, %v1352
        %v1354 = vrot.slane %v1287, %v1353
        %v1356 = vunpack.c.l.s4 1983009808
        %v1357 = vunpack.c.0.s8 %v1356
        %v1358 = vlaneseq
        %v1359 = vshrl.u32 %v1358, 7
        %v1360 = vsub.s32 %v1357, %v1359
        %v1361 = vrot.slane %v1347, %v1360
        %v1362 = vcombine.high %v1354, %v1354
        %v1363 = vcombine.high %v1361, %v1361
        %v1364 = vcombine.high %v1288, %v1288
        %v1366 = vunpack.c.l.s4 1983009808
        %v1367 = vunpack.c.0.s8 %v1366
        %v1368 = vlaneseq
        %v1369 = vshrl.u32 %v1368, 7
        %v1370 = vsub.s32 %v1367, %v1369
        %v1371 = vrot.slane %v1288, %v1370
        %v1373 = vunpack.c.l.s4 1983009808
        %v1374 = vunpack.c.0.s8 %v1373
        %v1375 = vlaneseq
        %v1376 = vshrl.u32 %v1375, 7
        %v1377 = vsub.s32 %v1374, %v1376
        %v1378 = vrot.slane %v1364, %v1377
        %v1379 = vcombine.high %v1371, %v1371
        %v1380 = vcombine.high %v1378, %v1378
        %v1381 = vcombine.high %v1289, %v1289
        %v1383 = vunpack.c.l.s4 1983009808
        %v1384 = vunpack.c.0.s8 %v1383
        %v1385 = vlaneseq
        %v1386 = vshrl.u32 %v1385, 7
        %v1387 = vsub.s32 %v1384, %v1386
        %v1388 = vrot.slane %v1289, %v1387
        %v1390 = vunpack.c.l.s4 1983009808
        %v1391 = vunpack.c.0.s8 %v1390
        %v1392 = vlaneseq
        %v1393 = vshrl.u32 %v1392, 7
        %v1394 = vsub.s32 %v1391, %v1393
        %v1395 = vrot.slane %v1381, %v1394
        %v1396 = vcombine.high %v1388, %v1388
        %v1397 = vcombine.high %v1395, %v1395
        %v1398 = vcombine.low %v1311, %v1310
        %v1400 = vunpack.c.l.s4 1983009808
        %v1401 = vunpack.c.0.s8 %v1400
        %v1402 = vlaneseq
        %v1403 = vshrl.u32 %v1402, 7
        %v1404 = vsub.s32 %v1401, %v1403
        %v1405 = vrot.slane %v1398, %v1404
        %v1406 = vcombine.low %v1320, %v1328
        %v1408 = vunpack.c.l.s4 1983009808
        %v1409 = vunpack.c.0.s8 %v1408
        %v1410 = vlaneseq
        %v1411 = vshrl.u32 %v1410, 7
        %v1412 = vsub.s32 %v1409, %v1411
        %v1413 = vrot.slane %v1406, %v1412
        %v1414 = vcombine.low %v1329, %v1337
        %v1416 = vunpack.c.l.s4 1983009808
        %v1417 = vunpack.c.0.s8 %v1416
        %v1418 = vlaneseq
        %v1419 = vshrl.u32 %v1418, 7
        %v1420 = vsub.s32 %v1417, %v1419
        %v1421 = vrot.slane %v1414, %v1420
        %v1422 = vcombine.low %v1344, %v1346
        %v1424 = vunpack.c.l.s4 1983009808
        %v1425 = vunpack.c.0.s8 %v1424
        %v1426 = vlaneseq
        %v1427 = vshrl.u32 %v1426, 7
        %v1428 = vsub.s32 %v1425, %v1427
        %v1429 = vrot.slane %v1422, %v1428
        %v1430 = vcombine.low %v1362, %v1361
        %v1432 = vunpack.c.l.s4 1983009808
        %v1433 = vunpack.c.0.s8 %v1432
        %v1434 = vlaneseq
        %v1435 = vshrl.u32 %v1434, 7
        %v1436 = vsub.s32 %v1433, %v1435
        %v1437 = vrot.slane %v1430, %v1436
        %v1438 = vcombine.low %v1371, %v1379
        %v1440 = vunpack.c.l.s4 1983009808
        %v1441 = vunpack.c.0.s8 %v1440
        %v1442 = vlaneseq
        %v1443 = vshrl.u32 %v1442, 7
        %v1444 = vsub.s32 %v1441, %v1443
        %v1445 = vrot.slane %v1438, %v1444
        %v1446 = vcombine.low %v1380, %v1388
        %v1448 = vunpack.c.l.s4 1983009808
        %v1449 = vunpack.c.0.s8 %v1448
        %v1450 = vlaneseq
        %v1451 = vshrl.u32 %v1450, 7
        %v1452 = vsub.s32 %v1449, %v1451
        %v1453 = vrot.slane %v1446, %v1452
        %v1454 = vcombine.low %v1395, %v1397
        %v1456 = vunpack.c.l.s4 1983009808
        %v1457 = vunpack.c.0.s8 %v1456
        %v1458 = vlaneseq
        %v1459 = vshrl.u32 %v1458, 7
        %v1460 = vsub.s32 %v1457, %v1459
        %v1461 = vrot.slane %v1454, %v1460
        %v1462 = vrot.slane %v1405, 1
        %v1463 = vrot.slane %v1413, 1
        %v1464 = vrot.slane %v1421, 1
        %v1465 = vrot.slane %v1429, 1
        %v1466 = vrot.slane %v1437, 1
        %v1467 = vrot.slane %v1445, 1
        %v1468 = vrot.slane %v1453, 1
        %v1469 = vrot.slane %v1461, 1
        %1470 = vrot.lane.b32.xlu0 %v1462, 64
        %v1471 = vpop.permute.xlu0 %1470
        %1472 = vrot.lane.b32.xlu0 %v1463, 64
        %v1473 = vpop.permute.xlu0 %1472
        %1474 = vrot.lane.b32.xlu0 %v1464, 64
        %v1475 = vpop.permute.xlu0 %1474
        %1476 = vrot.lane.b32.xlu0 %v1465, 64
        %v1477 = vpop.permute.xlu0 %1476
        %1478 = vrot.lane.b32.xlu0 %v1466, 64
        %v1479 = vpop.permute.xlu0 %1478
        %1480 = vrot.lane.b32.xlu0 %v1467, 64
        %v1481 = vpop.permute.xlu0 %1480
        %1482 = vrot.lane.b32.xlu0 %v1468, 64
        %v1483 = vpop.permute.xlu0 %1482
        %1484 = vrot.lane.b32.xlu0 %v1469, 64
        %v1485 = vpop.permute.xlu0 %1484
        %v1486 = vcombine.low %v1303, %v1311
        %v1488 = vunpack.c.l.s4 1983009808
        %v1489 = vunpack.c.0.s8 %v1488
        %v1490 = vlaneseq
        %v1491 = vshrl.u32 %v1490, 7
        %v1492 = vsub.s32 %v1489, %v1491
        %v1493 = vrot.slane %v1486, %v1492
        %v1494 = vcombine.low %v1312, %v1320
        %v1496 = vunpack.c.l.s4 1983009808
        %v1497 = vunpack.c.0.s8 %v1496
        %v1498 = vlaneseq
        %v1499 = vshrl.u32 %v1498, 7
        %v1500 = vsub.s32 %v1497, %v1499
        %v1501 = vrot.slane %v1494, %v1500
        %v1502 = vcombine.low %v1327, %v1329
        %v1504 = vunpack.c.l.s4 1983009808
        %v1505 = vunpack.c.0.s8 %v1504
        %v1506 = vlaneseq
        %v1507 = vshrl.u32 %v1506, 7
        %v1508 = vsub.s32 %v1505, %v1507
        %v1509 = vrot.slane %v1502, %v1508
        %v1510 = vcombine.low %v1345, %v1344
        %v1512 = vunpack.c.l.s4 1983009808
        %v1513 = vunpack.c.0.s8 %v1512
        %v1514 = vlaneseq
        %v1515 = vshrl.u32 %v1514, 7
        %v1516 = vsub.s32 %v1513, %v1515
        %v1517 = vrot.slane %v1510, %v1516
        %v1518 = vcombine.low %v1354, %v1362
        %v1520 = vunpack.c.l.s4 1983009808
        %v1521 = vunpack.c.0.s8 %v1520
        %v1522 = vlaneseq
        %v1523 = vshrl.u32 %v1522, 7
        %v1524 = vsub.s32 %v1521, %v1523
        %v1525 = vrot.slane %v1518, %v1524
        %v1526 = vcombine.low %v1363, %v1371
        %v1528 = vunpack.c.l.s4 1983009808
        %v1529 = vunpack.c.0.s8 %v1528
        %v1530 = vlaneseq
        %v1531 = vshrl.u32 %v1530, 7
        %v1532 = vsub.s32 %v1529, %v1531
        %v1533 = vrot.slane %v1526, %v1532
        %v1534 = vcombine.low %v1378, %v1380
        %v1536 = vunpack.c.l.s4 1983009808
        %v1537 = vunpack.c.0.s8 %v1536
        %v1538 = vlaneseq
        %v1539 = vshrl.u32 %v1538, 7
        %v1540 = vsub.s32 %v1537, %v1539
        %v1541 = vrot.slane %v1534, %v1540
        %v1542 = vcombine.low %v1396, %v1395
        %v1544 = vunpack.c.l.s4 1983009808
        %v1545 = vunpack.c.0.s8 %v1544
        %v1546 = vlaneseq
        %v1547 = vshrl.u32 %v1546, 7
        %v1548 = vsub.s32 %v1545, %v1547
        %v1549 = vrot.slane %v1542, %v1548
        %v1551 = vshrl.u32 %v1493, 16
        %v1553 = vshll.u32 %v1493, 16
        %v1555 = vrot.slane %v1553, 1
        %v1556 = vor.u32 %v1551, %v1555
        %v1558 = vshrl.u32 %v1501, 16
        %v1560 = vshll.u32 %v1501, 16
        %v1562 = vrot.slane %v1560, 1
        %v1563 = vor.u32 %v1558, %v1562
        %v1565 = vshrl.u32 %v1509, 16
        %v1567 = vshll.u32 %v1509, 16
        %v1569 = vrot.slane %v1567, 1
        %v1570 = vor.u32 %v1565, %v1569
        %v1572 = vshrl.u32 %v1517, 16
        %v1574 = vshll.u32 %v1517, 16
        %v1576 = vrot.slane %v1574, 1
        %v1577 = vor.u32 %v1572, %v1576
        %v1579 = vshrl.u32 %v1525, 16
        %v1581 = vshll.u32 %v1525, 16
        %v1583 = vrot.slane %v1581, 1
        %v1584 = vor.u32 %v1579, %v1583
        %v1586 = vshrl.u32 %v1533, 16
        %v1588 = vshll.u32 %v1533, 16
        %v1590 = vrot.slane %v1588, 1
        %v1591 = vor.u32 %v1586, %v1590
        %v1593 = vshrl.u32 %v1541, 16
        %v1595 = vshll.u32 %v1541, 16
        %v1597 = vrot.slane %v1595, 1
        %v1598 = vor.u32 %v1593, %v1597
        %v1600 = vshrl.u32 %v1549, 16
        %v1602 = vshll.u32 %v1549, 16
        %v1604 = vrot.slane %v1602, 1
        %v1605 = vor.u32 %v1600, %v1604
        %v1607 = vshrl.u32 %v1405, 16
        %v1609 = vrot.slane %v1607, 1
        %v1610 = vshll.u32 %v1405, 16
        %v1612 = vrot.slane %v1610, 2
        %v1613 = vor.u32 %v1609, %v1612
        %v1615 = vshrl.u32 %v1413, 16
        %v1617 = vrot.slane %v1615, 1
        %v1618 = vshll.u32 %v1413, 16
        %v1620 = vrot.slane %v1618, 2
        %v1621 = vor.u32 %v1617, %v1620
        %v1623 = vshrl.u32 %v1421, 16
        %v1625 = vrot.slane %v1623, 1
        %v1626 = vshll.u32 %v1421, 16
        %v1628 = vrot.slane %v1626, 2
        %v1629 = vor.u32 %v1625, %v1628
        %v1631 = vshrl.u32 %v1429, 16
        %v1633 = vrot.slane %v1631, 1
        %v1634 = vshll.u32 %v1429, 16
        %v1636 = vrot.slane %v1634, 2
        %v1637 = vor.u32 %v1633, %v1636
        %v1639 = vshrl.u32 %v1437, 16
        %v1641 = vrot.slane %v1639, 1
        %v1642 = vshll.u32 %v1437, 16
        %v1644 = vrot.slane %v1642, 2
        %v1645 = vor.u32 %v1641, %v1644
        %v1647 = vshrl.u32 %v1445, 16
        %v1649 = vrot.slane %v1647, 1
        %v1650 = vshll.u32 %v1445, 16
        %v1652 = vrot.slane %v1650, 2
        %v1653 = vor.u32 %v1649, %v1652
        %v1655 = vshrl.u32 %v1453, 16
        %v1657 = vrot.slane %v1655, 1
        %v1658 = vshll.u32 %v1453, 16
        %v1660 = vrot.slane %v1658, 2
        %v1661 = vor.u32 %v1657, %v1660
        %v1663 = vshrl.u32 %v1461, 16
        %v1665 = vrot.slane %v1663, 1
        %v1666 = vshll.u32 %v1461, 16
        %v1668 = vrot.slane %v1666, 2
        %v1669 = vor.u32 %v1665, %v1668
        %1670 = vrot.lane.b32.xlu0 %v1613, 64
        %v1671 = vpop.permute.xlu0 %1670
        %1672 = vrot.lane.b32.xlu0 %v1621, 64
        %v1673 = vpop.permute.xlu0 %1672
        %1674 = vrot.lane.b32.xlu0 %v1629, 64
        %v1675 = vpop.permute.xlu0 %1674
        %1676 = vrot.lane.b32.xlu0 %v1637, 64
        %v1677 = vpop.permute.xlu0 %1676
        %1678 = vrot.lane.b32.xlu0 %v1645, 64
        %v1679 = vpop.permute.xlu0 %1678
        %1680 = vrot.lane.b32.xlu0 %v1653, 64
        %v1681 = vpop.permute.xlu0 %1680
        %1682 = vrot.lane.b32.xlu0 %v1661, 64
        %v1683 = vpop.permute.xlu0 %1682
        %1684 = vrot.lane.b32.xlu0 %v1669, 64
        %v1685 = vpop.permute.xlu0 %1684
        %v1686 = vrot.slane %v1493, 1
        %v1687 = vrot.slane %v1501, 1
        %v1688 = vrot.slane %v1509, 1
        %v1689 = vrot.slane %v1517, 1
        %v1690 = vrot.slane %v1525, 1
        %v1691 = vrot.slane %v1533, 1
        %v1692 = vrot.slane %v1541, 1
        %v1693 = vrot.slane %v1549, 1
        %v1695 = vunpack.c.l.s4 1983009808
        %v1696 = vunpack.c.0.s8 %v1695
        %v1697 = vlaneseq
        %v1698 = vshrl.u32 %v1697, 7
        %v1699 = vsub.s32 %v1696, %v1698
        %v1700 = vrot.slane %v1310, %v1699
        %v1702 = vunpack.c.l.s4 1983009808
        %v1703 = vunpack.c.0.s8 %v1702
        %v1704 = vlaneseq
        %v1705 = vshrl.u32 %v1704, 7
        %v1706 = vsub.s32 %v1703, %v1705
        %v1707 = vrot.slane %v1328, %v1706
        %v1709 = vunpack.c.l.s4 1983009808
        %v1710 = vunpack.c.0.s8 %v1709
        %v1711 = vlaneseq
        %v1712 = vshrl.u32 %v1711, 7
        %v1713 = vsub.s32 %v1710, %v1712
        %v1714 = vrot.slane %v1337, %v1713
        %v1716 = vunpack.c.l.s4 1983009808
        %v1717 = vunpack.c.0.s8 %v1716
        %v1718 = vlaneseq
        %v1719 = vshrl.u32 %v1718, 7
        %v1720 = vsub.s32 %v1717, %v1719
        %v1721 = vrot.slane %v1346, %v1720
        %v1723 = vunpack.c.l.s4 1983009808
        %v1724 = vunpack.c.0.s8 %v1723
        %v1725 = vlaneseq
        %v1726 = vshrl.u32 %v1725, 7
        %v1727 = vsub.s32 %v1724, %v1726
        %v1728 = vrot.slane %v1361, %v1727
        %v1730 = vunpack.c.l.s4 1983009808
        %v1731 = vunpack.c.0.s8 %v1730
        %v1732 = vlaneseq
        %v1733 = vshrl.u32 %v1732, 7
        %v1734 = vsub.s32 %v1731, %v1733
        %v1735 = vrot.slane %v1379, %v1734
        %v1737 = vunpack.c.l.s4 1983009808
        %v1738 = vunpack.c.0.s8 %v1737
        %v1739 = vlaneseq
        %v1740 = vshrl.u32 %v1739, 7
        %v1741 = vsub.s32 %v1738, %v1740
        %v1742 = vrot.slane %v1388, %v1741
        %v1744 = vunpack.c.l.s4 1983009808
        %v1745 = vunpack.c.0.s8 %v1744
        %v1746 = vlaneseq
        %v1747 = vshrl.u32 %v1746, 7
        %v1748 = vsub.s32 %v1745, %v1747
        %v1749 = vrot.slane %v1397, %v1748
        %1750 = vrot.lane.b32.xlu0 %v1700, 64
        %v1751 = vpop.permute.xlu0 %1750
        %1752 = vrot.lane.b32.xlu0 %v1707, 64
        %v1753 = vpop.permute.xlu0 %1752
        %1754 = vrot.lane.b32.xlu0 %v1714, 64
        %v1755 = vpop.permute.xlu0 %1754
        %1756 = vrot.lane.b32.xlu0 %v1721, 64
        %v1757 = vpop.permute.xlu0 %1756
        %1758 = vrot.lane.b32.xlu0 %v1728, 64
        %v1759 = vpop.permute.xlu0 %1758
        %1760 = vrot.lane.b32.xlu0 %v1735, 64
        %v1761 = vpop.permute.xlu0 %1760
        %1762 = vrot.lane.b32.xlu0 %v1742, 64
        %v1763 = vpop.permute.xlu0 %1762
        %1764 = vrot.lane.b32.xlu0 %v1749, 64
        %v1765 = vpop.permute.xlu0 %1764
        %vm1766 = vcmask 523264
        %v1769 = vsel %vm1766, %v1303, %v1471
        %v1772 = vsel %vm1766, %v1312, %v1473
        %v1775 = vsel %vm1766, %v1327, %v1475
        %v1778 = vsel %vm1766, %v1345, %v1477
        %v1781 = vsel %vm1766, %v1354, %v1479
        %v1784 = vsel %vm1766, %v1363, %v1481
        %v1787 = vsel %vm1766, %v1378, %v1483
        %v1790 = vsel %vm1766, %v1396, %v1485
        %v1793 = vsel %vm1766, %v1556, %v1671
        %v1796 = vsel %vm1766, %v1563, %v1673
        %v1799 = vsel %vm1766, %v1570, %v1675
        %v1802 = vsel %vm1766, %v1577, %v1677
        %v1805 = vsel %vm1766, %v1584, %v1679
        %v1808 = vsel %vm1766, %v1591, %v1681
        %v1811 = vsel %vm1766, %v1598, %v1683
        %v1814 = vsel %vm1766, %v1605, %v1685
        %v1817 = vsel %vm1766, %v1686, %v1751
        %v1820 = vsel %vm1766, %v1687, %v1753
        %v1823 = vsel %vm1766, %v1688, %v1755
        %v1826 = vsel %vm1766, %v1689, %v1757
        %v1829 = vsel %vm1766, %v1690, %v1759
        %v1832 = vsel %vm1766, %v1691, %v1761
        %v1835 = vsel %vm1766, %v1692, %v1763
        %v1838 = vsel %vm1766, %v1693, %v1765
        %v1863 = vcombine.low %v1769, %v1793
        %v1865 = vunpack.c.l.s4 1983009808
        %v1866 = vunpack.c.0.s8 %v1865
        %v1867 = vlaneseq
        %v1868 = vshrl.u32 %v1867, 7
        %v1869 = vsub.s32 %v1866, %v1868
        %v1870 = vrot.slane %v1863, %v1869
        %v1872 = vunpack.c.l.s4 1983009808
        %v1873 = vunpack.c.0.s8 %v1872
        %v1874 = vlaneseq
        %v1875 = vshrl.u32 %v1874, 7
        %v1876 = vsub.s32 %v1873, %v1875
        %v1877 = vrot.slane %v1817, %v1876
        %v1878 = vcombine.low %v1870, %v1877
        %v1879 = vcombine.low %v1772, %v1796
        %v1881 = vunpack.c.l.s4 1983009808
        %v1882 = vunpack.c.0.s8 %v1881
        %v1883 = vlaneseq
        %v1884 = vshrl.u32 %v1883, 7
        %v1885 = vsub.s32 %v1882, %v1884
        %v1886 = vrot.slane %v1879, %v1885
        %v1888 = vunpack.c.l.s4 1983009808
        %v1889 = vunpack.c.0.s8 %v1888
        %v1890 = vlaneseq
        %v1891 = vshrl.u32 %v1890, 7
        %v1892 = vsub.s32 %v1889, %v1891
        %v1893 = vrot.slane %v1820, %v1892
        %v1894 = vcombine.low %v1886, %v1893
        %v1895 = vcombine.low %v1775, %v1799
        %v1897 = vunpack.c.l.s4 1983009808
        %v1898 = vunpack.c.0.s8 %v1897
        %v1899 = vlaneseq
        %v1900 = vshrl.u32 %v1899, 7
        %v1901 = vsub.s32 %v1898, %v1900
        %v1902 = vrot.slane %v1895, %v1901
        %v1904 = vunpack.c.l.s4 1983009808
        %v1905 = vunpack.c.0.s8 %v1904
        %v1906 = vlaneseq
        %v1907 = vshrl.u32 %v1906, 7
        %v1908 = vsub.s32 %v1905, %v1907
        %v1909 = vrot.slane %v1823, %v1908
        %v1910 = vcombine.low %v1902, %v1909
        %v1911 = vcombine.low %v1778, %v1802
        %v1913 = vunpack.c.l.s4 1983009808
        %v1914 = vunpack.c.0.s8 %v1913
        %v1915 = vlaneseq
        %v1916 = vshrl.u32 %v1915, 7
        %v1917 = vsub.s32 %v1914, %v1916
        %v1918 = vrot.slane %v1911, %v1917
        %v1920 = vunpack.c.l.s4 1983009808
        %v1921 = vunpack.c.0.s8 %v1920
        %v1922 = vlaneseq
        %v1923 = vshrl.u32 %v1922, 7
        %v1924 = vsub.s32 %v1921, %v1923
        %v1925 = vrot.slane %v1826, %v1924
        %v1926 = vcombine.low %v1918, %v1925
        %v1927 = vcombine.low %v1781, %v1805
        %v1929 = vunpack.c.l.s4 1983009808
        %v1930 = vunpack.c.0.s8 %v1929
        %v1931 = vlaneseq
        %v1932 = vshrl.u32 %v1931, 7
        %v1933 = vsub.s32 %v1930, %v1932
        %v1934 = vrot.slane %v1927, %v1933
        %v1936 = vunpack.c.l.s4 1983009808
        %v1937 = vunpack.c.0.s8 %v1936
        %v1938 = vlaneseq
        %v1939 = vshrl.u32 %v1938, 7
        %v1940 = vsub.s32 %v1937, %v1939
        %v1941 = vrot.slane %v1829, %v1940
        %v1942 = vcombine.low %v1934, %v1941
        %v1943 = vcombine.low %v1784, %v1808
        %v1945 = vunpack.c.l.s4 1983009808
        %v1946 = vunpack.c.0.s8 %v1945
        %v1947 = vlaneseq
        %v1948 = vshrl.u32 %v1947, 7
        %v1949 = vsub.s32 %v1946, %v1948
        %v1950 = vrot.slane %v1943, %v1949
        %v1952 = vunpack.c.l.s4 1983009808
        %v1953 = vunpack.c.0.s8 %v1952
        %v1954 = vlaneseq
        %v1955 = vshrl.u32 %v1954, 7
        %v1956 = vsub.s32 %v1953, %v1955
        %v1957 = vrot.slane %v1832, %v1956
        %v1958 = vcombine.low %v1950, %v1957
        %v1959 = vcombine.low %v1787, %v1811
        %v1961 = vunpack.c.l.s4 1983009808
        %v1962 = vunpack.c.0.s8 %v1961
        %v1963 = vlaneseq
        %v1964 = vshrl.u32 %v1963, 7
        %v1965 = vsub.s32 %v1962, %v1964
        %v1966 = vrot.slane %v1959, %v1965
        %v1968 = vunpack.c.l.s4 1983009808
        %v1969 = vunpack.c.0.s8 %v1968
        %v1970 = vlaneseq
        %v1971 = vshrl.u32 %v1970, 7
        %v1972 = vsub.s32 %v1969, %v1971
        %v1973 = vrot.slane %v1835, %v1972
        %v1974 = vcombine.low %v1966, %v1973
        %v1975 = vcombine.low %v1790, %v1814
        %v1977 = vunpack.c.l.s4 1983009808
        %v1978 = vunpack.c.0.s8 %v1977
        %v1979 = vlaneseq
        %v1980 = vshrl.u32 %v1979, 7
        %v1981 = vsub.s32 %v1978, %v1980
        %v1982 = vrot.slane %v1975, %v1981
        %v1984 = vunpack.c.l.s4 1983009808
        %v1985 = vunpack.c.0.s8 %v1984
        %v1986 = vlaneseq
        %v1987 = vshrl.u32 %v1986, 7
        %v1988 = vsub.s32 %v1985, %v1987
        %v1989 = vrot.slane %v1838, %v1988
        %v1990 = vcombine.low %v1982, %v1989
        %v1991 = vld [vmem:[%s4] sm:$0xff]
        %v1992 = vld [vmem:[%s4 + $0x8] sm:$0xff]
        %v1993 = vld [vmem:[%s4 + $0x10] sm:$0xff]
        %v1994 = vld [vmem:[%s4 + $0x18] sm:$0xff]
        %v1995 = vld [vmem:[%s4 + $0x20] sm:$0xff]
        %v1996 = vld [vmem:[%s4 + $0x28] sm:$0xff]
        %v1997 = vld [vmem:[%s4 + $0x30] sm:$0xff]
        %v1998 = vld [vmem:[%s4 + $0x38] sm:$0xff]
        %v1999 = vld [vmem:[%s4 + $0x40] sm:$0xff]
        %v2000 = vld [vmem:[%s4 + $0x48] sm:$0xff]
        %v2001 = vld [vmem:[%s4 + $0x50] sm:$0xff]
        %v2002 = vld [vmem:[%s4 + $0x58] sm:$0xff]
        %v2003 = vld [vmem:[%s4 + $0x60] sm:$0xff]
        %v2004 = vld [vmem:[%s4 + $0x68] sm:$0xff]
        %v2005 = vld [vmem:[%s4 + $0x70] sm:$0xff]
        %v2006 = vld [vmem:[%s4 + $0x78] sm:$0xff]
        %v2007 = vld [vmem:[%s4 + $0x80] sm:$0xff]
        %v2008 = vld [vmem:[%s4 + $0x88] sm:$0xff]
        %v2009 = vld [vmem:[%s4 + $0x90] sm:$0xff]
        %v2010 = vld [vmem:[%s4 + $0x98] sm:$0xff]
        %v2011 = vld [vmem:[%s4 + $0xa0] sm:$0xff]
        %v2012 = vld [vmem:[%s4 + $0xa8] sm:$0xff]
        %v2013 = vld [vmem:[%s4 + $0xb0] sm:$0xff]
        %v2014 = vld [vmem:[%s4 + $0xb8] sm:$0xff]
        %v2015 = vld [vmem:[%s4 + $0xc0] sm:$0xff]
        %v2016 = vld [vmem:[%s4 + $0xc8] sm:$0xff]
        %v2017 = vld [vmem:[%s4 + $0xd0] sm:$0xff]
        %v2018 = vld [vmem:[%s4 + $0xd8] sm:$0xff]
        %v2019 = vld [vmem:[%s4 + $0xe0] sm:$0xff]
        %v2020 = vld [vmem:[%s4 + $0xe8] sm:$0xff]
        %v2021 = vld [vmem:[%s4 + $0xf0] sm:$0xff]
        %v2022 = vld [vmem:[%s4 + $0xf8] sm:$0xff]
        %v2023 = vld [vmem:[%s4 + $0x100] sm:$0xff]
        %v2024 = vld [vmem:[%s4 + $0x108] sm:$0xff]
        %v2025 = vld [vmem:[%s4 + $0x110] sm:$0xff]
        %v2026 = vld [vmem:[%s4 + $0x118] sm:$0xff]
        %v2027 = vld [vmem:[%s4 + $0x120] sm:$0xff]
        %v2028 = vld [vmem:[%s4 + $0x128] sm:$0xff]
        %v2029 = vld [vmem:[%s4 + $0x130] sm:$0xff]
        %v2030 = vld [vmem:[%s4 + $0x138] sm:$0xff]
        %v2031 = vld [vmem:[%s4 + $0x140] sm:$0xff]
        %v2032 = vld [vmem:[%s4 + $0x148] sm:$0xff]
        %v2033 = vld [vmem:[%s4 + $0x150] sm:$0xff]
        %v2034 = vld [vmem:[%s4 + $0x158] sm:$0xff]
        %v2035 = vld [vmem:[%s4 + $0x160] sm:$0xff]
        %v2036 = vld [vmem:[%s4 + $0x168] sm:$0xff]
        %v2037 = vld [vmem:[%s4 + $0x170] sm:$0xff]
        %v2038 = vld [vmem:[%s4 + $0x178] sm:$0xff]
        %v2039 = vld [vmem:[%s5] sm:$0x3]
        %v2041 = vlaneseq
        %v2042 = vshrl.u32 %v2041, 7
        %v2043 = vsub.s32 0, %v2042
        %v2044 = vrot.slane %v2039, %v2043
        %v2045 = vlaneseq
        %v2046 = vshrl.u32 %v2045, 7
        %v2047 = vsub.s32 1, %v2046
        %v2048 = vrot.slane %v2039, %v2047
        %v2051 = vcombine.low %v1878, %v1894
        %v2052 = vcombine.high %v1878, %v1894
        %v2053 = vcombine.low %v1910, %v1926
        %v2054 = vcombine.high %v1910, %v1926
        %v2056 = vunpack.c.l.s4 1983009808
        %v2057 = vunpack.c.0.s8 %v2056
        %v2058 = vlaneseq
        %v2059 = vshrl.u32 %v2058, 7
        %v2060 = vsub.s32 %v2057, %v2059
        %v2061 = vrot.slane %v2051, %v2060
        %v2063 = vunpack.c.l.s4 1983009808
        %v2064 = vunpack.c.0.s8 %v2063
        %v2065 = vlaneseq
        %v2066 = vshrl.u32 %v2065, 7
        %v2067 = vsub.s32 %v2064, %v2066
        %v2068 = vrot.slane %v2052, %v2067
        %v2070 = vunpack.c.l.s4 1983009808
        %v2071 = vunpack.c.0.s8 %v2070
        %v2072 = vlaneseq
        %v2073 = vshrl.u32 %v2072, 7
        %v2074 = vsub.s32 %v2071, %v2073
        %v2075 = vrot.slane %v2053, %v2074
        %v2077 = vunpack.c.l.s4 1983009808
        %v2078 = vunpack.c.0.s8 %v2077
        %v2079 = vlaneseq
        %v2080 = vshrl.u32 %v2079, 7
        %v2081 = vsub.s32 %v2078, %v2080
        %v2082 = vrot.slane %v2054, %v2081
        %v2083 = vcombine.low %v2061, %v2075
        %v2084 = vcombine.high %v2061, %v2075
        %v2085 = vcombine.low %v2068, %v2082
        %v2086 = vcombine.low %v1942, %v1958
        %v2087 = vcombine.high %v1942, %v1958
        %v2088 = vcombine.low %v1974, %v1990
        %v2089 = vcombine.high %v1974, %v1990
        %v2091 = vunpack.c.l.s4 1983009808
        %v2092 = vunpack.c.0.s8 %v2091
        %v2093 = vlaneseq
        %v2094 = vshrl.u32 %v2093, 7
        %v2095 = vsub.s32 %v2092, %v2094
        %v2096 = vrot.slane %v2086, %v2095
        %v2098 = vunpack.c.l.s4 1983009808
        %v2099 = vunpack.c.0.s8 %v2098
        %v2100 = vlaneseq
        %v2101 = vshrl.u32 %v2100, 7
        %v2102 = vsub.s32 %v2099, %v2101
        %v2103 = vrot.slane %v2087, %v2102
        %v2105 = vunpack.c.l.s4 1983009808
        %v2106 = vunpack.c.0.s8 %v2105
        %v2107 = vlaneseq
        %v2108 = vshrl.u32 %v2107, 7
        %v2109 = vsub.s32 %v2106, %v2108
        %v2110 = vrot.slane %v2088, %v2109
        %v2112 = vunpack.c.l.s4 1983009808
        %v2113 = vunpack.c.0.s8 %v2112
        %v2114 = vlaneseq
        %v2115 = vshrl.u32 %v2114, 7
        %v2116 = vsub.s32 %v2113, %v2115
        %v2117 = vrot.slane %v2089, %v2116
        %v2118 = vcombine.low %v2096, %v2110
        %v2119 = vcombine.high %v2096, %v2110
        %v2120 = vcombine.low %v2103, %v2117
        %v2175 = vunpack.c.l.b16 %v1991
        %v2176 = vunpack.c.h.b16 %v1991
        %v2177 = vunpack.c.l.b16 %v1992
        %v2178 = vunpack.c.h.b16 %v1992
        %v2179 = vunpack.c.l.b16 %v1993
        %v2180 = vunpack.c.h.b16 %v1993
        %v2181 = vunpack.c.l.b16 %v1994
        %v2182 = vunpack.c.h.b16 %v1994
        %v2183 = vunpack.c.l.b16 %v1995
        %v2184 = vunpack.c.h.b16 %v1995
        %v2185 = vunpack.c.l.b16 %v1996
        %v2186 = vunpack.c.h.b16 %v1996
        %v2187 = vunpack.c.l.b16 %v1997
        %v2188 = vunpack.c.h.b16 %v1997
        %v2189 = vunpack.c.l.b16 %v1998
        %v2190 = vunpack.c.h.b16 %v1998
        %v2191 = vunpack.c.l.b16 %v1999
        %v2192 = vunpack.c.h.b16 %v1999
        %v2193 = vunpack.c.l.b16 %v2000
        %v2194 = vunpack.c.h.b16 %v2000
        %v2195 = vunpack.c.l.b16 %v2001
        %v2196 = vunpack.c.h.b16 %v2001
        %v2197 = vunpack.c.l.b16 %v2002
        %v2198 = vunpack.c.h.b16 %v2002
        %v2199 = vunpack.c.l.b16 %v2003
        %v2200 = vunpack.c.h.b16 %v2003
        %v2201 = vunpack.c.l.b16 %v2004
        %v2202 = vunpack.c.h.b16 %v2004
        %v2203 = vunpack.c.l.b16 %v2005
        %v2204 = vunpack.c.h.b16 %v2005
        %v2205 = vunpack.c.l.b16 %v2006
        %v2206 = vunpack.c.h.b16 %v2006
        %v2207 = vunpack.c.l.b16 %v2007
        %v2208 = vunpack.c.h.b16 %v2007
        %v2209 = vunpack.c.l.b16 %v2008
        %v2210 = vunpack.c.h.b16 %v2008
        %v2211 = vunpack.c.l.b16 %v2009
        %v2212 = vunpack.c.h.b16 %v2009
        %v2213 = vunpack.c.l.b16 %v2010
        %v2214 = vunpack.c.h.b16 %v2010
        %v2215 = vunpack.c.l.b16 %v2011
        %v2216 = vunpack.c.h.b16 %v2011
        %v2217 = vunpack.c.l.b16 %v2012
        %v2218 = vunpack.c.h.b16 %v2012
        %v2219 = vunpack.c.l.b16 %v2013
        %v2220 = vunpack.c.h.b16 %v2013
        %v2221 = vunpack.c.l.b16 %v2014
        %v2222 = vunpack.c.h.b16 %v2014
        %v2223 = vunpack.c.l.b16 %v2015
        %v2224 = vunpack.c.h.b16 %v2015
        %v2225 = vunpack.c.l.b16 %v2016
        %v2226 = vunpack.c.h.b16 %v2016
        %v2227 = vunpack.c.l.b16 %v2017
        %v2228 = vunpack.c.h.b16 %v2017
        %v2229 = vunpack.c.l.b16 %v2018
        %v2230 = vunpack.c.h.b16 %v2018
        %v2231 = vunpack.c.l.b16 %v2019
        %v2232 = vunpack.c.h.b16 %v2019
        %v2233 = vunpack.c.l.b16 %v2020
        %v2234 = vunpack.c.h.b16 %v2020
        %v2235 = vunpack.c.l.b16 %v2021
        %v2236 = vunpack.c.h.b16 %v2021
        %v2237 = vunpack.c.l.b16 %v2022
        %v2238 = vunpack.c.h.b16 %v2022
        %v2239 = vunpack.c.l.b16 %v2023
        %v2240 = vunpack.c.h.b16 %v2023
        %v2241 = vunpack.c.l.b16 %v2024
        %v2242 = vunpack.c.h.b16 %v2024
        %v2243 = vunpack.c.l.b16 %v2025
        %v2244 = vunpack.c.h.b16 %v2025
        %v2245 = vunpack.c.l.b16 %v2026
        %v2246 = vunpack.c.h.b16 %v2026
        %v2247 = vunpack.c.l.b16 %v2027
        %v2248 = vunpack.c.h.b16 %v2027
        %v2249 = vunpack.c.l.b16 %v2028
        %v2250 = vunpack.c.h.b16 %v2028
        %v2251 = vunpack.c.l.b16 %v2029
        %v2252 = vunpack.c.h.b16 %v2029
        %v2253 = vunpack.c.l.b16 %v2030
        %v2254 = vunpack.c.h.b16 %v2030
        %v2255 = vunpack.c.l.b16 %v2031
        %v2256 = vunpack.c.h.b16 %v2031
        %v2257 = vunpack.c.l.b16 %v2032
        %v2258 = vunpack.c.h.b16 %v2032
        %v2259 = vunpack.c.l.b16 %v2033
        %v2260 = vunpack.c.h.b16 %v2033
        %v2261 = vunpack.c.l.b16 %v2034
        %v2262 = vunpack.c.h.b16 %v2034
        %v2263 = vunpack.c.l.b16 %v2035
        %v2264 = vunpack.c.h.b16 %v2035
        %v2265 = vunpack.c.l.b16 %v2036
        %v2266 = vunpack.c.h.b16 %v2036
        %v2267 = vunpack.c.l.b16 %v2037
        %v2268 = vunpack.c.h.b16 %v2037
        %v2269 = vunpack.c.l.b16 %v2038
        %v2270 = vunpack.c.h.b16 %v2038
        %v2271 = vpack.c.b16 %v2177, %v2175
        %v2272 = vpack.c.b16 %v2178, %v2176
        %v2273 = vpack.c.b16 %v2181, %v2179
        %v2274 = vpack.c.b16 %v2182, %v2180
        %v2275 = vpack.c.b16 %v2185, %v2183
        %v2276 = vpack.c.b16 %v2186, %v2184
        %v2277 = vpack.c.b16 %v2189, %v2187
        %v2278 = vpack.c.b16 %v2190, %v2188
        %v2279 = vpack.c.b16 %v2193, %v2191
        %v2280 = vpack.c.b16 %v2194, %v2192
        %v2281 = vpack.c.b16 %v2197, %v2195
        %v2282 = vpack.c.b16 %v2198, %v2196
        %v2283 = vpack.c.b16 %v2201, %v2199
        %v2284 = vpack.c.b16 %v2202, %v2200
        %v2285 = vpack.c.b16 %v2205, %v2203
        %v2286 = vpack.c.b16 %v2206, %v2204
        %v2287 = vpack.c.b16 %v2209, %v2207
        %v2288 = vpack.c.b16 %v2210, %v2208
        %v2289 = vpack.c.b16 %v2213, %v2211
        %v2290 = vpack.c.b16 %v2214, %v2212
        %v2291 = vpack.c.b16 %v2217, %v2215
        %v2292 = vpack.c.b16 %v2218, %v2216
        %v2293 = vpack.c.b16 %v2221, %v2219
        %v2294 = vpack.c.b16 %v2222, %v2220
        %v2295 = vpack.c.b16 %v2225, %v2223
        %v2296 = vpack.c.b16 %v2226, %v2224
        %v2297 = vpack.c.b16 %v2229, %v2227
        %v2298 = vpack.c.b16 %v2230, %v2228
        %v2299 = vpack.c.b16 %v2233, %v2231
        %v2300 = vpack.c.b16 %v2234, %v2232
        %v2301 = vpack.c.b16 %v2237, %v2235
        %v2302 = vpack.c.b16 %v2238, %v2236
        %v2303 = vpack.c.b16 %v2241, %v2239
        %v2304 = vpack.c.b16 %v2242, %v2240
        %v2305 = vpack.c.b16 %v2245, %v2243
        %v2306 = vpack.c.b16 %v2246, %v2244
        %v2307 = vpack.c.b16 %v2249, %v2247
        %v2308 = vpack.c.b16 %v2250, %v2248
        %v2309 = vpack.c.b16 %v2253, %v2251
        %v2310 = vpack.c.b16 %v2254, %v2252
        %v2311 = vpack.c.b16 %v2257, %v2255
        %v2312 = vpack.c.b16 %v2258, %v2256
        %v2313 = vpack.c.b16 %v2261, %v2259
        %v2314 = vpack.c.b16 %v2262, %v2260
        %v2315 = vpack.c.b16 %v2265, %v2263
        %v2316 = vpack.c.b16 %v2266, %v2264
        %v2317 = vpack.c.b16 %v2269, %v2267
        %v2318 = vpack.c.b16 %v2270, %v2268
        %2367 = vmatprep.subr.bf16.mxu0 %v2286
        %2368 = vmatpush1.bf16.msra.mxu0 %v2285
        %2369 = vmatprep.subr.bf16.mxu0 %v2284
        %2370 = vmatpush1.bf16.msra.mxu0 %v2283
        %2371 = vmatprep.subr.bf16.mxu0 %v2282
        %2372 = vmatpush1.bf16.msra.mxu0 %v2281
        %2373 = vmatprep.subr.bf16.mxu0 %v2280
        %2374 = vmatpush1.bf16.msra.mxu0 %v2279
        %2375 = vmatprep.subr.bf16.mxu0 %v2278
        %2376 = vmatpush1.bf16.msra.mxu0 %v2277
        %2377 = vmatprep.subr.bf16.mxu0 %v2276
        %2378 = vmatpush1.bf16.msra.mxu0 %v2275
        %2379 = vmatprep.subr.bf16.mxu0 %v2274
        %2380 = vmatpush1.bf16.msra.mxu0 %v2273
        %2381 = vmatprep.subr.bf16.mxu0 %v2272
        %2382 = vmatpush1.bf16.msra.mxu0 %v2271
        %2383 = vmatprep.subr.bf16.mxu0 %v2302
        %2384 = vmatpush2.bf16.msra.mxu0 %v2301
        %2385 = vmatprep.subr.bf16.mxu0 %v2300
        %2386 = vmatpush2.bf16.msra.mxu0 %v2299
        %2387 = vmatprep.subr.bf16.mxu0 %v2298
        %2388 = vmatpush2.bf16.msra.mxu0 %v2297
        %2389 = vmatprep.subr.bf16.mxu0 %v2296
        %2390 = vmatpush2.bf16.msra.mxu0 %v2295
        %2391 = vmatprep.subr.bf16.mxu0 %v2294
        %2392 = vmatpush2.bf16.msra.mxu0 %v2293
        %2393 = vmatprep.subr.bf16.mxu0 %v2292
        %2394 = vmatpush2.bf16.msra.mxu0 %v2291
        %2395 = vmatprep.subr.bf16.mxu0 %v2290
        %2396 = vmatpush2.bf16.msra.mxu0 %v2289
        %2397 = vmatprep.subr.bf16.mxu0 %v2288
        %2398 = vmatpush2.bf16.msra.mxu0 %v2287
        %2399 = vmatprep.mubr.bf16.mxu0 %v2084
        %2400 = vmatmul.mubr.bf16.gmra.mxu0 %v2083
        %v2401 = vpop.f32.mrf.mxu0
        %v2402 = vadd.f32 %v2044, %v2401
        %v2403 = vpop.f32.mrf.mxu0
        %v2404 = vadd.f32 %v2048, %v2403
        %v2405 = vpop.f32.mrf.mxu0
        %v2406 = vadd.f32 %v2044, %v2405
        %v2407 = vpop.f32.mrf.mxu0
        %v2408 = vadd.f32 %v2048, %v2407
        %2409 = vmatprep.mubr.bf16.mxu0 %v2119
        %2410 = vmatmul.mubr.bf16.gmra.mxu0 %v2118
        %v2411 = vpop.f32.mrf.mxu0
        %v2412 = vadd.f32 %v2044, %v2411
        %v2413 = vpop.f32.mrf.mxu0
        %v2414 = vadd.f32 %v2048, %v2413
        %v2415 = vpop.f32.mrf.mxu0
        %v2416 = vadd.f32 %v2044, %v2415
        %v2417 = vpop.f32.mrf.mxu0
        %v2418 = vadd.f32 %v2048, %v2417
        %2419 = vdwg.mxu0
        %2420 = vmatprep.subr.bf16.mxu0 %v2318
        %2421 = vmatpush1.bf16.msra.mxu0 %v2317
        %2422 = vmatprep.subr.bf16.mxu0 %v2316
        %2423 = vmatpush1.bf16.msra.mxu0 %v2315
        %2424 = vmatprep.subr.bf16.mxu0 %v2314
        %2425 = vmatpush1.bf16.msra.mxu0 %v2313
        %2426 = vmatprep.subr.bf16.mxu0 %v2312
        %2427 = vmatpush1.bf16.msra.mxu0 %v2311
        %2428 = vmatprep.subr.bf16.mxu0 %v2310
        %2429 = vmatpush1.bf16.msra.mxu0 %v2309
        %2430 = vmatprep.subr.bf16.mxu0 %v2308
        %2431 = vmatpush1.bf16.msra.mxu0 %v2307
        %2432 = vmatprep.subr.bf16.mxu0 %v2306
        %2433 = vmatpush1.bf16.msra.mxu0 %v2305
        %2434 = vmatprep.subr.bf16.mxu0 %v2304
        %2435 = vmatpush1.bf16.msra.mxu0 %v2303
        %2436 = vmatprep.subr.bf16.mxu0 0
        %2437 = vmatpush2.bf16.msra.mxu0 0
        %2438 = vmatprep.subr.bf16.mxu0 0
        %2439 = vmatpush2.bf16.msra.mxu0 0
        %2440 = vmatprep.subr.bf16.mxu0 0
        %2441 = vmatpush2.bf16.msra.mxu0 0
        %2442 = vmatprep.subr.bf16.mxu0 0
        %2443 = vmatpush2.bf16.msra.mxu0 0
        %2444 = vmatprep.subr.bf16.mxu0 0
        %2445 = vmatpush2.bf16.msra.mxu0 0
        %2446 = vmatprep.subr.bf16.mxu0 0
        %2447 = vmatpush2.bf16.msra.mxu0 0
        %2448 = vmatprep.subr.bf16.mxu0 0
        %2449 = vmatpush2.bf16.msra.mxu0 0
        %2450 = vmatprep.subr.bf16.mxu0 0
        %2451 = vmatpush2.bf16.msra.mxu0 0
        %2452 = vmatprep.mubr.bf16.mxu0 0
        %2453 = vmatmul.mubr.bf16.gmra.mxu0 %v2085
        %v2454 = vpop.f32.mrf.mxu0
        %v2455 = vadd.f32 %v2402, %v2454
        %v2456 = vpop.f32.mrf.mxu0
        %v2457 = vadd.f32 %v2404, %v2456
        %v2458 = vpop.f32.mrf.mxu0
        %v2459 = vadd.f32 %v2406, %v2458
        %v2460 = vpop.f32.mrf.mxu0
        %v2461 = vadd.f32 %v2408, %v2460
        %2462 = vmatprep.mubr.bf16.mxu0 0
        %2463 = vmatmul.mubr.bf16.gmra.mxu0 %v2120
        %v2464 = vpop.f32.mrf.mxu0
        %v2465 = vadd.f32 %v2412, %v2464
        %v2466 = vpop.f32.mrf.mxu0
        %v2467 = vadd.f32 %v2414, %v2466
        %v2468 = vpop.f32.mrf.mxu0
        %v2469 = vadd.f32 %v2416, %v2468
        %v2470 = vpop.f32.mrf.mxu0
        %v2471 = vadd.f32 %v2418, %v2470
        %2472 = vdwg.mxu0
        %v2473 = vmax.f32 %v2455, 0.0
        %v2474 = vmax.f32 %v2457, 0.0
        %v2475 = vmax.f32 %v2459, 0.0
        %v2476 = vmax.f32 %v2461, 0.0
        %v2477 = vmax.f32 %v2465, 0.0
        %v2478 = vmax.f32 %v2467, 0.0
        %v2479 = vmax.f32 %v2469, 0.0
        %v2480 = vmax.f32 %v2471, 0.0
        %v2481 = vmax.f32 %v2473, %v2474
        %v2482 = vmax.f32 %v2475, %v2476
        %v2483 = vmax.f32 %v2477, %v2478
        %v2484 = vmax.f32 %v2479, %v2480
        %2489 = vrot.lane.b32.xlu0 %v2481, 64
        %v2490 = vpop.permute.xlu0 %2489
        %2491 = vrot.lane.b32.xlu0 %v2482, 64
        %v2492 = vpop.permute.xlu0 %2491
        %2493 = vrot.lane.b32.xlu0 %v2483, 64
        %v2494 = vpop.permute.xlu0 %2493
        %2495 = vrot.lane.b32.xlu0 %v2484, 64
        %v2496 = vpop.permute.xlu0 %2495
        %v2501 = vmax.f32 %v2481, %v2490
        %v2502 = vmax.f32 %v2482, %v2492
        %v2503 = vmax.f32 %v2483, %v2494
        %v2504 = vmax.f32 %v2484, %v2496
        %v2505 = vld [vmem:[%s6] sm:$0x1]
        %v2506 = vlaneseq
        %v2507 = vshrl.u32 %v2506, 7
        %v2508 = vsub.s32 0, %v2507
        %v2509 = vrot.slane %v2505, %v2508
        %v2510 = vmul.f32 %v2501, %v2509
        %v2511 = vmul.f32 %v2502, %v2509
        %v2512 = vmul.f32 %v2503, %v2509
        %v2513 = vmul.f32 %v2504, %v2509
        %v2514 = vld [vmem:[%s6 + $0x1] sm:$0x1]
        %v2515 = vlaneseq
        %v2516 = vshrl.u32 %v2515, 7
        %v2517 = vsub.s32 0, %v2516
        %v2518 = vrot.slane %v2514, %v2517
        %v2519 = vadd.f32 %v2510, %v2518
        %v2520 = vadd.f32 %v2511, %v2518
        %v2521 = vadd.f32 %v2512, %v2518
        %v2522 = vadd.f32 %v2513, %v2518
        %v2523 = vpack.c.bf16 %v2520, %v2519
        %v2524 = vpack.c.bf16 %v2522, %v2521
        %v2527 = vcombine.high %v2523, %v2523
        %v2529 = vunpack.c.l.s4 1983009808
        %v2530 = vunpack.c.0.s8 %v2529
        %v2531 = vlaneseq
        %v2532 = vshrl.u32 %v2531, 7
        %v2533 = vsub.s32 %v2530, %v2532
        %v2534 = vrot.slane %v2523, %v2533
        %v2536 = vunpack.c.l.s4 1983009808
        %v2537 = vunpack.c.0.s8 %v2536
        %v2538 = vlaneseq
        %v2539 = vshrl.u32 %v2538, 7
        %v2540 = vsub.s32 %v2537, %v2539
        %v2541 = vrot.slane %v2527, %v2540
        %v2542 = vcombine.high %v2534, %v2534
        %v2543 = vcombine.high %v2541, %v2541
        %v2544 = vcombine.high %v2524, %v2524
        %v2546 = vunpack.c.l.s4 1983009808
        %v2547 = vunpack.c.0.s8 %v2546
        %v2548 = vlaneseq
        %v2549 = vshrl.u32 %v2548, 7
        %v2550 = vsub.s32 %v2547, %v2549
        %v2551 = vrot.slane %v2524, %v2550
        %v2553 = vunpack.c.l.s4 1983009808
        %v2554 = vunpack.c.0.s8 %v2553
        %v2555 = vlaneseq
        %v2556 = vshrl.u32 %v2555, 7
        %v2557 = vsub.s32 %v2554, %v2556
        %v2558 = vrot.slane %v2544, %v2557
        %v2559 = vcombine.high %v2551, %v2551
        %v2560 = vcombine.high %v2558, %v2558
        %v2562 = vunpack.c.l.s4 1983009808
        %v2563 = vunpack.c.0.s8 %v2562
        %v2564 = vlaneseq
        %v2565 = vshrl.u32 %v2564, 7
        %v2566 = vsub.s32 %v2563, %v2565
        %v2567 = vrot.slane %v2534, %v2566
        %v2569 = vunpack.c.l.s4 1983009808
        %v2570 = vunpack.c.0.s8 %v2569
        %v2571 = vlaneseq
        %v2572 = vshrl.u32 %v2571, 7
        %v2573 = vsub.s32 %v2570, %v2572
        %v2574 = vrot.slane %v2542, %v2573
        %v2576 = vunpack.c.l.s4 1983009808
        %v2577 = vunpack.c.0.s8 %v2576
        %v2578 = vlaneseq
        %v2579 = vshrl.u32 %v2578, 7
        %v2580 = vsub.s32 %v2577, %v2579
        %v2581 = vrot.slane %v2541, %v2580
        %v2583 = vunpack.c.l.s4 1983009808
        %v2584 = vunpack.c.0.s8 %v2583
        %v2585 = vlaneseq
        %v2586 = vshrl.u32 %v2585, 7
        %v2587 = vsub.s32 %v2584, %v2586
        %v2588 = vrot.slane %v2543, %v2587
        %v2590 = vunpack.c.l.s4 1983009808
        %v2591 = vunpack.c.0.s8 %v2590
        %v2592 = vlaneseq
        %v2593 = vshrl.u32 %v2592, 7
        %v2594 = vsub.s32 %v2591, %v2593
        %v2595 = vrot.slane %v2551, %v2594
        %v2597 = vunpack.c.l.s4 1983009808
        %v2598 = vunpack.c.0.s8 %v2597
        %v2599 = vlaneseq
        %v2600 = vshrl.u32 %v2599, 7
        %v2601 = vsub.s32 %v2598, %v2600
        %v2602 = vrot.slane %v2559, %v2601
        %v2604 = vunpack.c.l.s4 1983009808
        %v2605 = vunpack.c.0.s8 %v2604
        %v2606 = vlaneseq
        %v2607 = vshrl.u32 %v2606, 7
        %v2608 = vsub.s32 %v2605, %v2607
        %v2609 = vrot.slane %v2558, %v2608
        %v2611 = vunpack.c.l.s4 1983009808
        %v2612 = vunpack.c.0.s8 %v2611
        %v2613 = vlaneseq
        %v2614 = vshrl.u32 %v2613, 7
        %v2615 = vsub.s32 %v2612, %v2614
        %v2616 = vrot.slane %v2560, %v2615
        %v2617 = vunpack.c.l.b16 %v2567
        %v2618 = vunpack.c.l.b16 %v2574
        %v2619 = vunpack.c.l.b16 %v2581
        %v2620 = vunpack.c.l.b16 %v2588
        %v2621 = vunpack.c.l.b16 %v2595
        %v2622 = vunpack.c.l.b16 %v2602
        %v2623 = vunpack.c.l.b16 %v2609
        %v2624 = vunpack.c.l.b16 %v2616
        %v2625 = vrot.slane %v2618, 7
        %vm2626 = vcmask 1041409
        %v2627 = vsel %vm2626, %v2625, %v2617
        %v2628 = vrot.slane %v2619, 6
        %vm2629 = vcmask 1042434
        %v2630 = vsel %vm2629, %v2628, %v2627
        %v2631 = vrot.slane %v2620, 5
        %vm2632 = vcmask 1043459
        %v2633 = vsel %vm2632, %v2631, %v2630
        %v2634 = vrot.slane %v2621, 4
        %vm2635 = vcmask 1044484
        %v2636 = vsel %vm2635, %v2634, %v2633
        %v2637 = vrot.slane %v2622, 3
        %vm2638 = vcmask 1045509
        %v2639 = vsel %vm2638, %v2637, %v2636
        %v2640 = vrot.slane %v2623, 2
        %vm2641 = vcmask 1046534
        %v2642 = vsel %vm2641, %v2640, %v2639
        %v2643 = vrot.slane %v2624, 1
        %vm2644 = vcmask 1047559
        %v2645 = vsel %vm2644, %v2643, %v2642
        %v2646 = vpack.c.b16 %v2645, %v2645
        %v2647 = vrot.slane %v2617, 1
        %v2648 = vsel %vm2626, %v2618, %v2647
        %v2649 = vrot.slane %v2619, 7
        %v2650 = vsel %vm2629, %v2649, %v2648
        %v2651 = vrot.slane %v2620, 6
        %v2652 = vsel %vm2632, %v2651, %v2650
        %v2653 = vrot.slane %v2621, 5
        %v2654 = vsel %vm2635, %v2653, %v2652
        %v2655 = vrot.slane %v2622, 4
        %v2656 = vsel %vm2638, %v2655, %v2654
        %v2657 = vrot.slane %v2623, 3
        %v2658 = vsel %vm2641, %v2657, %v2656
        %v2659 = vrot.slane %v2624, 2
        %v2660 = vsel %vm2644, %v2659, %v2658
        %v2661 = vpack.c.b16 %v2660, %v2660
        %2662 = vrot.lane.b32.xlu0 %v2661, 64
        %v2663 = vpop.permute.xlu0 %2662
        %v2664 = vrot.slane %v2617, 2
        %v2665 = vrot.slane %v2618, 1
        %v2666 = vsel %vm2626, %v2665, %v2664
        %v2667 = vsel %vm2629, %v2619, %v2666
        %v2668 = vrot.slane %v2620, 7
        %v2669 = vsel %vm2632, %v2668, %v2667
        %v2670 = vrot.slane %v2621, 6
        %v2671 = vsel %vm2635, %v2670, %v2669
        %v2672 = vrot.slane %v2622, 5
        %v2673 = vsel %vm2638, %v2672, %v2671
        %v2674 = vrot.slane %v2623, 4
        %v2675 = vsel %vm2641, %v2674, %v2673
        %v2676 = vrot.slane %v2624, 3
        %v2677 = vsel %vm2644, %v2676, %v2675
        %v2678 = vpack.c.b16 %v2677, %v2677
        %v2679 = vrot.slane %v2617, 3
        %v2680 = vrot.slane %v2618, 2
        %v2681 = vsel %vm2626, %v2680, %v2679
        %v2682 = vrot.slane %v2619, 1
        %v2683 = vsel %vm2629, %v2682, %v2681
        %v2684 = vsel %vm2632, %v2620, %v2683
        %v2685 = vrot.slane %v2621, 7
        %v2686 = vsel %vm2635, %v2685, %v2684
        %v2687 = vrot.slane %v2622, 6
        %v2688 = vsel %vm2638, %v2687, %v2686
        %v2689 = vrot.slane %v2623, 5
        %v2690 = vsel %vm2641, %v2689, %v2688
        %v2691 = vrot.slane %v2624, 4
        %v2692 = vsel %vm2644, %v2691, %v2690
        %v2693 = vpack.c.b16 %v2692, %v2692
        %2694 = vrot.lane.b32.xlu0 %v2693, 64
        %v2695 = vpop.permute.xlu0 %2694
        %v2698 = vsel %vm1766, %v2646, %v2663
        %v2702 = vsel %vm1766, %v2678, %v2695
        %v2704 = vld [vmem:[%s7] sm:$0xf]
        %v2705 = vld [vmem:[%s7 + $0x4] sm:$0xf]
        %v2706 = vld [vmem:[%s7 + $0x8] sm:$0xf]
        %v2707 = vld [vmem:[%s7 + $0xc] sm:$0xf]
        %v2708 = vld [vmem:[%s7 + $0x10] sm:$0xf]
        %v2709 = vld [vmem:[%s7 + $0x14] sm:$0xf]
        %v2710 = vld [vmem:[%s7 + $0x18] sm:$0xf]
        %v2711 = vld [vmem:[%s7 + $0x1c] sm:$0xf]
        %v2712 = vld [vmem:[%s7 + $0x20] sm:$0xf]
        %v2713 = vld [vmem:[%s7 + $0x24] sm:$0xf]
        %v2714 = vld [vmem:[%s7 + $0x28] sm:$0xf]
        %v2715 = vld [vmem:[%s7 + $0x2c] sm:$0xf]
        %v2716 = vld [vmem:[%s7 + $0x30] sm:$0xf]
        %v2717 = vld [vmem:[%s7 + $0x34] sm:$0xf]
        %v2718 = vld [vmem:[%s7 + $0x38] sm:$0xf]
        %v2719 = vld [vmem:[%s7 + $0x3c] sm:$0xf]
        %v2720 = vld [vmem:[%s7 + $0x40] sm:$0xf]
        %v2721 = vld [vmem:[%s7 + $0x44] sm:$0xf]
        %v2722 = vld [vmem:[%s7 + $0x48] sm:$0xf]
        %v2723 = vld [vmem:[%s7 + $0x4c] sm:$0xf]
        %v2724 = vld [vmem:[%s7 + $0x50] sm:$0xf]
        %v2725 = vld [vmem:[%s7 + $0x54] sm:$0xf]
        %v2726 = vld [vmem:[%s7 + $0x58] sm:$0xf]
        %v2727 = vld [vmem:[%s7 + $0x5c] sm:$0xf]
        %v2728 = vld [vmem:[%s7 + $0x60] sm:$0xf]
        %v2729 = vld [vmem:[%s7 + $0x64] sm:$0xf]
        %v2730 = vld [vmem:[%s7 + $0x68] sm:$0xf]
        %v2731 = vld [vmem:[%s7 + $0x6c] sm:$0xf]
        %v2732 = vld [vmem:[%s7 + $0x70] sm:$0xf]
        %v2733 = vld [vmem:[%s7 + $0x74] sm:$0xf]
        %v2734 = vld [vmem:[%s7 + $0x78] sm:$0xf]
        %v2735 = vld [vmem:[%s7 + $0x7c] sm:$0xf]
        %v2736 = vld [vmem:[%s8] sm:$0x1]
        %v2737 = vlaneseq
        %v2738 = vshrl.u32 %v2737, 7
        %v2739 = vsub.s32 0, %v2738
        %v2740 = vrot.slane %v2736, %v2739
        %v2773 = vunpack.c.l.b16 %v2704
        %v2774 = vunpack.c.l.b16 %v2705
        %v2775 = vunpack.c.l.b16 %v2706
        %v2776 = vunpack.c.l.b16 %v2707
        %v2777 = vunpack.c.l.b16 %v2708
        %v2778 = vunpack.c.l.b16 %v2709
        %v2779 = vunpack.c.l.b16 %v2710
        %v2780 = vunpack.c.l.b16 %v2711
        %v2781 = vunpack.c.l.b16 %v2712
        %v2782 = vunpack.c.l.b16 %v2713
        %v2783 = vunpack.c.l.b16 %v2714
        %v2784 = vunpack.c.l.b16 %v2715
        %v2785 = vunpack.c.l.b16 %v2716
        %v2786 = vunpack.c.l.b16 %v2717
        %v2787 = vunpack.c.l.b16 %v2718
        %v2788 = vunpack.c.l.b16 %v2719
        %v2789 = vunpack.c.l.b16 %v2720
        %v2790 = vunpack.c.l.b16 %v2721
        %v2791 = vunpack.c.l.b16 %v2722
        %v2792 = vunpack.c.l.b16 %v2723
        %v2793 = vunpack.c.l.b16 %v2724
        %v2794 = vunpack.c.l.b16 %v2725
        %v2795 = vunpack.c.l.b16 %v2726
        %v2796 = vunpack.c.l.b16 %v2727
        %v2797 = vunpack.c.l.b16 %v2728
        %v2798 = vunpack.c.l.b16 %v2729
        %v2799 = vunpack.c.l.b16 %v2730
        %v2800 = vunpack.c.l.b16 %v2731
        %v2801 = vunpack.c.l.b16 %v2732
        %v2802 = vunpack.c.l.b16 %v2733
        %v2803 = vunpack.c.l.b16 %v2734
        %v2804 = vunpack.c.l.b16 %v2735
        %v2805 = vpack.c.b16 %v2774, %v2773
        %v2806 = vpack.c.b16 %v2776, %v2775
        %v2807 = vpack.c.b16 %v2778, %v2777
        %v2808 = vpack.c.b16 %v2780, %v2779
        %v2809 = vpack.c.b16 %v2782, %v2781
        %v2810 = vpack.c.b16 %v2784, %v2783
        %v2811 = vpack.c.b16 %v2786, %v2785
        %v2812 = vpack.c.b16 %v2788, %v2787
        %v2813 = vpack.c.b16 %v2790, %v2789
        %v2814 = vpack.c.b16 %v2792, %v2791
        %v2815 = vpack.c.b16 %v2794, %v2793
        %v2816 = vpack.c.b16 %v2796, %v2795
        %v2817 = vpack.c.b16 %v2798, %v2797
        %v2818 = vpack.c.b16 %v2800, %v2799
        %v2819 = vpack.c.b16 %v2802, %v2801
        %v2820 = vpack.c.b16 %v2804, %v2803
        %2837 = vmatprep.subr.bf16.mxu0 0
        %2838 = vmatpush1.bf16.msra.mxu0 %v2812
        %2839 = vmatprep.subr.bf16.mxu0 0
        %2840 = vmatpush1.bf16.msra.mxu0 %v2811
        %2841 = vmatprep.subr.bf16.mxu0 0
        %2842 = vmatpush1.bf16.msra.mxu0 %v2810
        %2843 = vmatprep.subr.bf16.mxu0 0
        %2844 = vmatpush1.bf16.msra.mxu0 %v2809
        %2845 = vmatprep.subr.bf16.mxu0 0
        %2846 = vmatpush1.bf16.msra.mxu0 %v2808
        %2847 = vmatprep.subr.bf16.mxu0 0
        %2848 = vmatpush1.bf16.msra.mxu0 %v2807
        %2849 = vmatprep.subr.bf16.mxu0 0
        %2850 = vmatpush1.bf16.msra.mxu0 %v2806
        %2851 = vmatprep.subr.bf16.mxu0 0
        %2852 = vmatpush1.bf16.msra.mxu0 %v2805
        %2853 = vmatprep.subr.bf16.mxu0 0
        %2854 = vmatpush2.bf16.msra.mxu0 %v2820
        %2855 = vmatprep.subr.bf16.mxu0 0
        %2856 = vmatpush2.bf16.msra.mxu0 %v2819
        %2857 = vmatprep.subr.bf16.mxu0 0
        %2858 = vmatpush2.bf16.msra.mxu0 %v2818
        %2859 = vmatprep.subr.bf16.mxu0 0
        %2860 = vmatpush2.bf16.msra.mxu0 %v2817
        %2861 = vmatprep.subr.bf16.mxu0 0
        %2862 = vmatpush2.bf16.msra.mxu0 %v2816
        %2863 = vmatprep.subr.bf16.mxu0 0
        %2864 = vmatpush2.bf16.msra.mxu0 %v2815
        %2865 = vmatprep.subr.bf16.mxu0 0
        %2866 = vmatpush2.bf16.msra.mxu0 %v2814
        %2867 = vmatprep.subr.bf16.mxu0 0
        %2868 = vmatpush2.bf16.msra.mxu0 %v2813
        %2869 = vmatprep.mubr.bf16.mxu0 %v2702
        %2870 = vmatmul.mubr.bf16.gmra.mxu0 %v2698
        %v2871 = vpop.f32.mrf.mxu0
        %v2872 = vadd.f32 %v2740, %v2871
        %v2873 = vpop.f32.mrf.mxu0
        %v2874 = vpop.f32.mrf.mxu0
        %v2875 = vpop.f32.mrf.mxu0
        %2876 = vdwg.mxu0
        %v2877 = vmax.f32 %v2872, 0.0
        %v2878 = vld [vmem:[%s8 + $0x1] sm:$0x1]
        %v2879 = vlaneseq
        %v2880 = vshrl.u32 %v2879, 7
        %v2881 = vsub.s32 0, %v2880
        %v2882 = vrot.slane %v2878, %v2881
        %v2883 = vmul.f32 %v2877, %v2882
        %v2884 = vld [vmem:[%s8 + $0x2] sm:$0x1]
        %v2885 = vlaneseq
        %v2886 = vshrl.u32 %v2885, 7
        %v2887 = vsub.s32 0, %v2886
        %v2888 = vrot.slane %v2884, %v2887
        %v2889 = vadd.f32 %v2883, %v2888
        %v2890 = vpack.c.bf16 %v2889, %v2889
        %v2891 = vld [vmem:[%s9] sm:$0xf]
        %v2892 = vld [vmem:[%s9 + $0x4] sm:$0xf]
        %v2893 = vld [vmem:[%s9 + $0x8] sm:$0xf]
        %v2894 = vld [vmem:[%s9 + $0xc] sm:$0xf]
        %v2895 = vld [vmem:[%s9 + $0x10] sm:$0xf]
        %v2896 = vld [vmem:[%s9 + $0x14] sm:$0xf]
        %v2897 = vld [vmem:[%s9 + $0x18] sm:$0xf]
        %v2898 = vld [vmem:[%s9 + $0x1c] sm:$0xf]
        %v2899 = vld [vmem:[%s9 + $0x20] sm:$0xf]
        %v2900 = vld [vmem:[%s9 + $0x24] sm:$0xf]
        %v2901 = vld [vmem:[%s10] sm:$0x1]
        %v2903 = vlaneseq
        %v2904 = vshrl.u32 %v2903, 7
        %v2905 = vsub.s32 0, %v2904
        %v2906 = vrot.slane %v2901, %v2905
        %v2918 = vunpack.c.l.b16 %v2891
        %v2919 = vunpack.c.l.b16 %v2892
        %v2920 = vunpack.c.l.b16 %v2893
        %v2921 = vunpack.c.l.b16 %v2894
        %v2922 = vunpack.c.l.b16 %v2895
        %v2923 = vunpack.c.l.b16 %v2896
        %v2924 = vunpack.c.l.b16 %v2897
        %v2925 = vunpack.c.l.b16 %v2898
        %v2926 = vunpack.c.l.b16 %v2899
        %v2927 = vunpack.c.l.b16 %v2900
        %v2928 = vpack.c.b16 %v2919, %v2918
        %v2929 = vpack.c.b16 %v2921, %v2920
        %v2930 = vpack.c.b16 %v2923, %v2922
        %v2931 = vpack.c.b16 %v2925, %v2924
        %v2932 = vpack.c.b16 %v2927, %v2926
        %vm2938 = vcmask 654336
        %v2940 = vsel %vm2938, %v2890, 0
        %2942 = vmatprep.subr.bf16.mxu0 0
        %2943 = vmatpush1.bf16.msra.mxu0 0
        %2944 = vmatprep.subr.bf16.mxu0 0
        %2945 = vmatpush1.bf16.msra.mxu0 0
        %2946 = vmatprep.subr.bf16.mxu0 0
        %2947 = vmatpush1.bf16.msra.mxu0 0
        %2948 = vmatprep.subr.bf16.mxu0 0
        %2949 = vmatpush1.bf16.msra.mxu0 %v2932
        %2950 = vmatprep.subr.bf16.mxu0 0
        %2951 = vmatpush1.bf16.msra.mxu0 %v2931
        %2952 = vmatprep.subr.bf16.mxu0 0
        %2953 = vmatpush1.bf16.msra.mxu0 %v2930
        %2954 = vmatprep.subr.bf16.mxu0 0
        %2955 = vmatpush1.bf16.msra.mxu0 %v2929
        %2956 = vmatprep.subr.bf16.mxu0 0
        %2957 = vmatpush1.bf16.msra.mxu0 %v2928
        %2958 = vmatprep.subr.bf16.mxu0 0
        %2959 = vmatpush2.bf16.msra.mxu0 0
        %2960 = vmatprep.subr.bf16.mxu0 0
        %2961 = vmatpush2.bf16.msra.mxu0 0
        %2962 = vmatprep.subr.bf16.mxu0 0
        %2963 = vmatpush2.bf16.msra.mxu0 0
        %2964 = vmatprep.subr.bf16.mxu0 0
        %2965 = vmatpush2.bf16.msra.mxu0 0
        %2966 = vmatprep.subr.bf16.mxu0 0
        %2967 = vmatpush2.bf16.msra.mxu0 0
        %2968 = vmatprep.subr.bf16.mxu0 0
        %2969 = vmatpush2.bf16.msra.mxu0 0
        %2970 = vmatprep.subr.bf16.mxu0 0
        %2971 = vmatpush2.bf16.msra.mxu0 0
        %2972 = vmatprep.subr.bf16.mxu0 0
        %2973 = vmatpush2.bf16.msra.mxu0 0
        %2974 = vmatprep.mubr.bf16.mxu0 0
        %2975 = vmatmul.mubr.bf16.gmra.mxu0 %v2940
        %v2976 = vpop.f32.mrf.mxu0
        %v2977 = vadd.f32 %v2906, %v2976
        %v2978 = vpop.f32.mrf.mxu0
        %v2979 = vpop.f32.mrf.mxu0
        %v2980 = vpop.f32.mrf.mxu0
        %2981 = vdwg.mxu0
        %vm2982 = vcmask 80896
        %2983 = vst.msk [vmem:[%s380] sm:$0xff] %vm2982, %v2977
        %s2984 = sand.u32 %s269, 1
        %s2985 = scalar_lea.sflag [#allocation3], %s2984
        %s2986 = sand.u32 %s269, 1
        %s2987 = smul.addr %s2986, 8
        %s2988 = scalar_lea.vmem [#allocation2], %s2987
        // Predicated region
        $region65: #{fashion_forward.1} parent=63 // pred_check
          %p2989 = pneg %p279
        $region66: #{fashion_forward.1} parent=63 // pred_check_branch
          %2991 = sbr.rel (%p2989) target = $region68
        $region67: #{fashion_forward.1} parent=63 // pred_region
          %s2993 = ssub.s32 128, 128
          %2994 = vsyncadd %s2985, %s2993
          %s2995 = smul.addr %s25, 128
          %s2996 = scalar_lea.hbm %s11, %s2995
          %s2998 = sshll.u32 %s2988, 4
          %s2999 = int_to_ptr.vmem [resolvable:$true] %s2998
          %3001 = dma.vmem_to_hbm [thread:$0]  %s2999, 128, %s2996, %s2985
        $region68: #{fashion_forward.1} parent=63 // pred_fallthru
          _
      $region64: #{fashion_forward.1} parent=5 // pred_fallthru
        _
      %p3002 = scmp.le.s32.totalorder 2, %s20
      // Predicated region
      $region69: #{fashion_forward.1} parent=5 // pred_check
        %p3003 = pneg %p3002
      $region70: #{fashion_forward.1} parent=5 // pred_check_branch
        %3005 = sbr.rel (%p3003) target = $region72
      $region71: #{fashion_forward.1} parent=5 // pred_region
        %s3006 = ssub.s32 %s20, 2
        // Predicated region
        $region73: #{fashion_forward.1} parent=71 // pred_check
          %p3007 = pneg %p285
        $region74: #{fashion_forward.1} parent=71 // pred_check_branch
          %3009 = sbr.rel (%p3007) target = $region76
        $region75: #{fashion_forward.1} parent=71 // pred_region
          %s3010 = sand.u32 %s270, 1
          %s3011 = scalar_lea.sflag [#allocation3], %s3010
          %s3012 = sand.u32 %s270, 1
          %s3013 = smul.addr %s3012, 8
          %s3014 = scalar_lea.vmem [#allocation2], %s3013
          %3015 = dma.done %s3011, 128
        $region76: #{fashion_forward.1} parent=71 // pred_fallthru
          _
      $region72: #{fashion_forward.1} parent=5 // pred_fallthru
        _
    $region6: #{fashion_forward.1} parent=1 // loop_footer
      %s24 = sadd.s32 1, %s20
    $region7: #{fashion_forward.1} parent=1 // loop_footer_branch
      %19 = sbr.rel target = $region3
    $region8: #{fashion_forward.1} parent=1 // loop_exit
      _
    %3016 = vsyncpa [#allocation3], 1
    %s3017 = scalar_lea.sflag [#allocation3], 1
    %3018 = vsyncpa %s3017, 1

</llo_original>
